<compile_context>
chip_gen: v6e
topology: v6e:2x2x1
jax: 0.10.0
libtpu: 0.0.40
codegen_flags: <defaults>
</compile_context>

<pallas_src>
import jax
import jax.numpy as jnp
from jax import lax
from jax.experimental import pallas as pl
from jax.experimental.pallas import tpu as pltpu

_VMEM_LIMIT_BYTES = 48 * 1024 * 1024


def _round_up(x, m):
    return ((x + m - 1) // m) * m


# --------------------------------------------------------------------------
# Tiled matmul + bias kernel (vocab / generic projection).
# Grid = (M tiles, N tiles, K tiles); K is the reduction axis ("arbitrary"),
# M/N are "parallel" (megacore sharding on v7x).
# --------------------------------------------------------------------------
def _matmul_bias_kernel(x_ref, w_ref, b_ref, o_ref, acc_ref):
    @pl.when(pl.program_id(2) == 0)
    def _():
        acc_ref[...] = jnp.zeros_like(acc_ref)

    acc_ref[...] += jnp.dot(x_ref[...], w_ref[...],
                            preferred_element_type=jnp.float32)

    @pl.when(pl.program_id(2) == pl.num_programs(2) - 1)
    def _():
        o_ref[...] = (acc_ref[...] + b_ref[...]).astype(o_ref.dtype)


def matmul_bias(x, w, b, *, out_dtype=jnp.float32, tm=128, tn=256, tk=256):
    """(M,K) @ (K,N) + b(1,N).  bf16-friendly operands, f32 accumulation."""
    M, K = x.shape
    _, N = w.shape
    # Adapt tiles to the problem so tiny shapes are not padded to huge tiles.
    tm = min(tm, _round_up(M, 8))
    tk = min(tk, _round_up(K, 128))
    tn = min(tn, _round_up(N, 128))
    Mp, Kp, Np = _round_up(M, tm), _round_up(K, tk), _round_up(N, tn)
    x = jnp.pad(x, ((0, Mp - M), (0, Kp - K)))
    w = jnp.pad(w, ((0, Kp - K), (0, Np - N)))
    b = jnp.pad(b.astype(jnp.float32), ((0, 0), (0, Np - N)))

    out = pl.pallas_call(
        _matmul_bias_kernel,
        out_shape=jax.ShapeDtypeStruct((Mp, Np), out_dtype),
        grid_spec=pltpu.PrefetchScalarGridSpec(
            num_scalar_prefetch=0,
            grid=(Mp // tm, Np // tn, Kp // tk),
            in_specs=[pl.BlockSpec((tm, tk), lambda i, j, k: (i, k)),
                      pl.BlockSpec((tk, tn), lambda i, j, k: (k, j)),
                      pl.BlockSpec((1, tn), lambda i, j, k: (0, j))],
            out_specs=pl.BlockSpec((tm, tn), lambda i, j, k: (i, j)),
            scratch_shapes=[pltpu.VMEM((tm, tn), jnp.float32)]),
        compiler_params=pltpu.CompilerParams(
            dimension_semantics=("parallel", "parallel", "arbitrary"),
            vmem_limit_bytes=_VMEM_LIMIT_BYTES),
    )(x, w, b)
    return out[:M, :N]


# --------------------------------------------------------------------------
# Fused LSTM kernel: per time-block it computes x @ W_ih^T + bias as ONE MXU
# matmul into VMEM scratch (no HBM roundtrip of x_gates), then runs the truly
# serial recurrence (h @ W_hh + gate math) over the block.  h/c persist in
# VMEM scratch across the time-block grid; W_ih / W_hh stay VMEM-resident
# (constant index maps -> fetched once).
# --------------------------------------------------------------------------
def _lstm_fused_kernel(x_ref, wih_ref, whh_ref, b_ref, hs_ref,
                       xg_sc, h_sc, c_sc):
    """x_ref (tT,Bp,Ep) bf16, wih (Ep,4Hp) bf16, whh (Hp,4Hp) bf16,
       b (1,4Hp) f32, hs_ref (tT,Bp,Hp) bf16."""
    @pl.when(pl.program_id(0) == 0)
    def _():
        h_sc[...] = jnp.zeros_like(h_sc)
        c_sc[...] = jnp.zeros_like(c_sc)

    tT, Bp, Ep = x_ref.shape
    Hp = h_sc.shape[1]
    w_ih = wih_ref[...]                      # resident weights (hoisted loads)
    w_hh = whh_ref[...]
    bias = b_ref[...]                        # (1, 4Hp) f32

    # Block-level input projection: one (tT*Bp, Ep) @ (Ep, 4Hp) matmul.
    x_blk = x_ref[...].reshape(tT * Bp, Ep)
    xg = jnp.dot(x_blk, w_ih, preferred_element_type=jnp.float32) + bias
    xg_sc[...] = xg.reshape(tT, Bp, 4 * Hp)

    def step(t, carry):
        gates = xg_sc[t] + jnp.dot(h_sc[...].astype(w_hh.dtype), w_hh,
                                   preferred_element_type=jnp.float32)
        # PyTorch gate order: input, forget, cell(g), output.
        # Hp is a multiple of 128 -> all slices are lane-aligned (free views).
        i_g = jax.nn.sigmoid(gates[:, 0 * Hp:1 * Hp])
        f_g = jax.nn.sigmoid(gates[:, 1 * Hp:2 * Hp])
        g_g = jnp.tanh(gates[:, 2 * Hp:3 * Hp])
        o_g = jax.nn.sigmoid(gates[:, 3 * Hp:4 * Hp])

        c_new = f_g * c_sc[...] + i_g * g_g
        h_new = o_g * jnp.tanh(c_new)
        c_sc[...] = c_new
        h_sc[...] = h_new
        hs_ref[t] = h_new.astype(hs_ref.dtype)
        return carry

    lax.fori_loop(0, tT, step, 0, unroll=True)


def lstm_fused(x_tbe, w_ih_t, w_hh_t, bias, *, time_block):
    Tp, Bp, Ep = x_tbe.shape
    Hp = w_hh_t.shape[0]
    G = w_hh_t.shape[1]
    return pl.pallas_call(
        _lstm_fused_kernel,
        out_shape=jax.ShapeDtypeStruct((Tp, Bp, Hp), jnp.bfloat16),
        grid_spec=pltpu.PrefetchScalarGridSpec(
            num_scalar_prefetch=0,
            grid=(Tp // time_block,),
            in_specs=[pl.BlockSpec((time_block, Bp, Ep), lambda t: (t, 0, 0)),
                      pl.BlockSpec((Ep, G), lambda t: (0, 0)),
                      pl.BlockSpec((Hp, G), lambda t: (0, 0)),
                      pl.BlockSpec((1, G), lambda t: (0, 0))],
            out_specs=pl.BlockSpec((time_block, Bp, Hp), lambda t: (t, 0, 0)),
            scratch_shapes=[pltpu.VMEM((time_block, Bp, G), jnp.float32),  # xg
                            pltpu.VMEM((Bp, Hp), jnp.float32),            # h
                            pltpu.VMEM((Bp, Hp), jnp.float32)]),          # c
        compiler_params=pltpu.CompilerParams(
            dimension_semantics=("arbitrary",),
            vmem_limit_bytes=_VMEM_LIMIT_BYTES),
    )(x_tbe, w_ih_t, w_hh_t, bias)


# --------------------------------------------------------------------------
# Forward pass (mirrors DecoderRNN.forward).
# --------------------------------------------------------------------------
def decoder_rnn_forward(params, features, captions, *,
                        compute_dtype=jnp.bfloat16, time_block=8):
    B, E = features.shape
    H = params["w_hh"].shape[1]
    V = params["w_out"].shape[0]

    # Glue: embedding gather + concat of features as timestep 0 (plain JAX).
    # TODO(synk): embedding lookup stays a jnp.take gather in the wrapper.
    caps = captions[:, :-1]
    emb = jnp.take(params["embed"], caps, axis=0)                       # (B,T-1,E)
    x_bte = jnp.concatenate([features[:, None, :], emb], axis=1)
    x_bte = x_bte.astype(jnp.float32)                                   # (B,T,E)
    T = x_bte.shape[1]

    # TPU-friendly padded sizes (sublane=8, lane=128).
    Bp = _round_up(B, 8)
    Ep = _round_up(E, 128)
    Hp = _round_up(H, 128)
    Vp = _round_up(V, 128)
    tb = min(time_block, T)
    Tp = _round_up(T, tb)

    # Time-major, padded, bf16 input (matmul operand only).
    x_tbe = jnp.transpose(x_bte, (1, 0, 2))
    x_tbe = jnp.pad(x_tbe, ((0, Tp - T), (0, Bp - B), (0, Ep - E)))
    x_tbe = x_tbe.astype(compute_dtype)

    def pack_gates(w_or_b):
        """(4H, ...) -> (4Hp, ...): pad each gate block to Hp (lane aligned)."""
        rest = w_or_b.shape[1:]
        g4 = w_or_b.reshape((4, H) + rest)
        g4 = jnp.pad(g4, ((0, 0), (0, Hp - H)) + ((0, 0),) * len(rest))
        return g4.reshape((4 * Hp,) + rest)

    w_ih_t = jnp.pad(pack_gates(params["w_ih"]), ((0, 0), (0, Ep - E))).T  # (Ep,4Hp)
    w_hh_t = jnp.pad(pack_gates(params["w_hh"]), ((0, 0), (0, Hp - H))).T  # (Hp,4Hp)
    bias = pack_gates(params["b_ih"] + params["b_hh"])[None, :]            # (1,4Hp)
    bias = bias.astype(jnp.float32)
    w_out_t = jnp.pad(params["w_out"], ((0, Vp - V), (0, Hp - H))).T       # (Hp,Vp)
    b_out = jnp.pad(params["b_out"], (0, Vp - V))[None, :]                 # (1,Vp)

    # Phase 1+2 fused: input projection per time-block + serial recurrence.
    hs = lstm_fused(x_tbe,
                    w_ih_t.astype(compute_dtype),
                    w_hh_t.astype(compute_dtype),
                    bias, time_block=tb)                                   # bf16

    # Phase 3: batched vocab projection, tiled over (rows, vocab).
    hs2d = hs.reshape(Tp * Bp, Hp)
    logits = matmul_bias(hs2d, w_out_t.astype(compute_dtype), b_out)       # f32
    logits = logits.reshape(Tp, Bp, Vp)[:T, :B, :V]

    return jnp.transpose(logits, (1, 0, 2))                                # (B,T,V)


# --------------------------------------------------------------------------
# Pure-JAX reference (mirrors torch semantics) for correctness checking.
# --------------------------------------------------------------------------
def _reference_forward(params, features, captions):
    caps = captions[:, :-1]
    emb = jnp.take(params["embed"], caps, axis=0)
    x = jnp.concatenate([features[:, None, :], emb], axis=1).astype(jnp.float32)
    B, T, E = x.shape
    H = params["w_hh"].shape[1]
    h = jnp.zeros((B, H), jnp.float32)
    c = jnp.zeros((B, H), jnp.float32)
    bias = params["b_ih"] + params["b_hh"]

    def step(carry, x_t):
        h, c = carry
        g = x_t @ params["w_ih"].T + h @ params["w_hh"].T + bias
        i_g = jax.nn.sigmoid(g[:, 0 * H:1 * H])
        f_g = jax.nn.sigmoid(g[:, 1 * H:2 * H])
        g_g = jnp.tanh(g[:, 2 * H:3 * H])
        o_g = jax.nn.sigmoid(g[:, 3 * H:4 * H])
        c = f_g * c + i_g * g_g
        h = o_g * jnp.tanh(c)
        return (h, c), h

    (_, _), hs = lax.scan(step, (h, c), jnp.transpose(x, (1, 0, 2)))
    hs = jnp.transpose(hs, (1, 0, 2))                                      # (B,T,H)
    return hs @ params["w_out"].T + params["b_out"][None, None, :]


def init_params(key, embed_size, hidden_size, vocab_size):
    ks = jax.random.split(key, 7)
    s = 0.1
    return {
        "embed": s * jax.random.normal(ks[0], (vocab_size, embed_size), jnp.float32),
        "w_ih": s * jax.random.normal(ks[1], (4 * hidden_size, embed_size), jnp.float32),
        "w_hh": s * jax.random.normal(ks[2], (4 * hidden_size, hidden_size), jnp.float32),
        "b_ih": s * jax.random.normal(ks[3], (4 * hidden_size,), jnp.float32),
        "b_hh": s * jax.random.normal(ks[4], (4 * hidden_size,), jnp.float32),
        "w_out": s * jax.random.normal(ks[5], (vocab_size, hidden_size), jnp.float32),
        "b_out": s * jax.random.normal(ks[6], (vocab_size,), jnp.float32),
    }


if __name__ == "__main__":
    batch = 2
    embed_size = 32
    hidden_size = 32
    vocab_size = 128
    cap_len = 8          # captions length L -> T = 1 + (L-1) = 8 LSTM steps

    key = jax.random.PRNGKey(0)
    k_params, k_feat, k_cap = jax.random.split(key, 3)

    params = init_params(k_params, embed_size, hidden_size, vocab_size)
    features = jax.random.normal(k_feat, (batch, embed_size), jnp.float32)
    captions = jax.random.randint(k_cap, (batch, cap_len), 0, vocab_size, jnp.int32)

    fwd = jax.jit(decoder_rnn_forward)
    out = fwd(params, features, captions)
    out = jax.block_until_ready(out)

    ref = _reference_forward(params, features, captions)
    assert out.shape == (batch, cap_len, vocab_size), out.shape
    # bf16 MXU operands with f32 accumulation -> loose-but-safe tolerance.
    assert jnp.allclose(out, ref, atol=2e-2, rtol=2e-2), float(
        jnp.max(jnp.abs(out - ref)))

    print("KERNEL_OK")
</pallas_src>

<mosaic_0001>
module attributes {stable_mosaic.version = 11 : i64} {
  func.func @_matmul_bias_kernel(%arg0: i32, %arg1: i32, %arg2: i32, %arg3: memref<64x128xbf16, #tpu.memory_space<vmem>>, %arg4: memref<128x128xbf16, #tpu.memory_space<vmem>>, %arg5: memref<1x128xf32, #tpu.memory_space<vmem>>, %arg6: memref<64x128xf32, #tpu.memory_space<vmem>>, %arg7: memref<64x128xf32, #tpu.memory_space<vmem>>) attributes {dimension_semantics = [#tpu.dimension_semantics<parallel>, #tpu.dimension_semantics<parallel>, #tpu.dimension_semantics<arbitrary>], iteration_bounds = array<i64: 1, 1, 1>, scalar_prefetch = 0 : i64, scratch_operands = 1 : i64, tpu.core_type = #tpu.core_type<tc>, window_params = [{transform_indices = @transform_0, window_bounds = array<i64: 64, 128>}, {transform_indices = @transform_1, window_bounds = array<i64: 128, 128>}, {transform_indices = @transform_2, window_bounds = array<i64: 1, 128>}, {transform_indices = @transform_3, window_bounds = array<i64: 64, 128>}]} {
    %c0_i32 = arith.constant 0 : i32
    %0 = arith.cmpi eq, %arg2, %c0_i32 : i32
    %1 = arith.extui %0 : i1 to i32
    %c0_i32_0 = arith.constant 0 : i32
    %2 = arith.cmpi ne, %1, %c0_i32_0 : i32
    scf.if %2 {
      %cst_10 = arith.constant 0.000000e+00 : f32
      %12 = vector.broadcast %cst_10 : f32 to vector<64x128xf32>
      %c0_11 = arith.constant 0 : index
      %c0_12 = arith.constant 0 : index
      %13 = vector.load %arg7[%c0_11, %c0_12] : memref<64x128xf32, #tpu.memory_space<vmem>>, vector<64x128xf32>
      tpu.vector_store %arg7[%c0_11, %c0_12], %12 {strides = array<i32>} : memref<64x128xf32, #tpu.memory_space<vmem>>, vector<64x128xf32>,
    } else {
    }
    %c0 = arith.constant 0 : index
    %c0_1 = arith.constant 0 : index
    %3 = vector.load %arg7[%c0, %c0_1] : memref<64x128xf32, #tpu.memory_space<vmem>>, vector<64x128xf32>
    %c0_2 = arith.constant 0 : index
    %c0_3 = arith.constant 0 : index
    %4 = vector.load %arg3[%c0_2, %c0_3] : memref<64x128xbf16, #tpu.memory_space<vmem>>, vector<64x128xbf16>
    %c0_4 = arith.constant 0 : index
    %c0_5 = arith.constant 0 : index
    %5 = vector.load %arg4[%c0_4, %c0_5] : memref<128x128xbf16, #tpu.memory_space<vmem>>, vector<128x128xbf16>
    %cst = arith.constant dense<0.000000e+00> : vector<64x128xf32>
    %6 = tpu.matmul %4, %5, %cst {dimension_numbers = #tpu.dot_dimension_numbers<[1], [0], [0], [1], [0, 0, 1, 1], [], []>} : vector<64x128xbf16>, vector<128x128xbf16>, vector<64x128xf32> -> vector<64x128xf32>
    %7 = arith.addf %3, %6 : vector<64x128xf32>
    %c0_6 = arith.constant 0 : index
    %c0_7 = arith.constant 0 : index
    %8 = vector.load %arg7[%c0_6, %c0_7] : memref<64x128xf32, #tpu.memory_space<vmem>>, vector<64x128xf32>
    tpu.vector_store %arg7[%c0_6, %c0_7], %7 {strides = array<i32>} : memref<64x128xf32, #tpu.memory_space<vmem>>, vector<64x128xf32>,
    %c0_i32_8 = arith.constant 0 : i32
    %9 = arith.cmpi eq, %arg2, %c0_i32_8 : i32
    %10 = arith.extui %9 : i1 to i32
    %c0_i32_9 = arith.constant 0 : i32
    %11 = arith.cmpi ne, %10, %c0_i32_9 : i32
    scf.if %11 {
      %c0_10 = arith.constant 0 : index
      %c0_11 = arith.constant 0 : index
      %12 = vector.load %arg7[%c0_10, %c0_11] : memref<64x128xf32, #tpu.memory_space<vmem>>, vector<64x128xf32>
      %c0_12 = arith.constant 0 : index
      %c0_13 = arith.constant 0 : index
      %13 = vector.load %arg5[%c0_12, %c0_13] : memref<1x128xf32, #tpu.memory_space<vmem>>, vector<1x128xf32>
      %14 = vector.broadcast %13 : vector<1x128xf32> to vector<64x128xf32>
      %15 = arith.addf %12, %14 : vector<64x128xf32>
      %c0_14 = arith.constant 0 : index
      %c0_15 = arith.constant 0 : index
      %16 = vector.load %arg6[%c0_14, %c0_15] : memref<64x128xf32, #tpu.memory_space<vmem>>, vector<64x128xf32>
      tpu.vector_store %arg6[%c0_14, %c0_15], %15 {strides = array<i32>} : memref<64x128xf32, #tpu.memory_space<vmem>>, vector<64x128xf32>,
    } else {
    }
    return
  }
  func.func @transform_0(%arg0: i32, %arg1: i32, %arg2: i32) -> (i32, i32) {
    %c0_i32 = arith.constant 0 : i32
    return %arg0, %arg2 : i32, i32
  }
  func.func @transform_1(%arg0: i32, %arg1: i32, %arg2: i32) -> (i32, i32) {
    %c0_i32 = arith.constant 0 : i32
    return %arg2, %arg1 : i32, i32
  }
  func.func @transform_2(%arg0: i32, %arg1: i32, %arg2: i32) -> (i32, i32) {
    %c0_i32 = arith.constant 0 : i32
    %c0_i32_0 = arith.constant 0 : i32
    return %c0_i32, %arg1 : i32, i32
  }
  func.func @transform_3(%arg0: i32, %arg1: i32, %arg2: i32) -> (i32, i32) {
    %c0_i32 = arith.constant 0 : i32
    return %arg0, %arg1 : i32, i32
  }
}

module attributes {stable_mosaic.version = 11 : i64} {
  func.func @_lstm_fused_kernel(%arg0: i32, %arg1: memref<8x8x128xbf16, #tpu.memory_space<vmem>>, %arg2: memref<128x512xbf16, #tpu.memory_space<vmem>>, %arg3: memref<128x512xbf16, #tpu.memory_space<vmem>>, %arg4: memref<1x512xf32, #tpu.memory_space<vmem>>, %arg5: memref<8x8x128xbf16, #tpu.memory_space<vmem>>, %arg6: memref<8x8x512xf32, #tpu.memory_space<vmem>>, %arg7: memref<8x128xf32, #tpu.memory_space<vmem>>, %arg8: memref<8x128xf32, #tpu.memory_space<vmem>>) attributes {dimension_semantics = [#tpu.dimension_semantics<arbitrary>], iteration_bounds = array<i64: 1>, scalar_prefetch = 0 : i64, scratch_operands = 3 : i64, tpu.core_type = #tpu.core_type<tc>, window_params = [{transform_indices = @transform_0, window_bounds = array<i64: 8, 8, 128>}, {pipeline_mode = #tpu.pipeline_mode<synchronous>, transform_indices = @transform_1, window_bounds = array<i64: 128, 512>}, {pipeline_mode = #tpu.pipeline_mode<synchronous>, transform_indices = @transform_2, window_bounds = array<i64: 128, 512>}, {pipeline_mode = #tpu.pipeline_mode<synchronous>, transform_indices = @transform_3, window_bounds = array<i64: 1, 512>}, {transform_indices = @transform_4, window_bounds = array<i64: 8, 8, 128>}]} {
    %c0_i32 = arith.constant 0 : i32
    %0 = arith.cmpi eq, %arg0, %c0_i32 : i32
    %1 = arith.extui %0 : i1 to i32
    %c0_i32_0 = arith.constant 0 : i32
    %2 = arith.cmpi ne, %1, %c0_i32_0 : i32
    scf.if %2 {
      %cst_141 = arith.constant 0.000000e+00 : f32
      %333 = vector.broadcast %cst_141 : f32 to vector<8x128xf32>
      %c0_142 = arith.constant 0 : index
      %c0_143 = arith.constant 0 : index
      %334 = vector.load %arg7[%c0_142, %c0_143] : memref<8x128xf32, #tpu.memory_space<vmem>>, vector<8x128xf32>
      tpu.vector_store %arg7[%c0_142, %c0_143], %333 {strides = array<i32>} : memref<8x128xf32, #tpu.memory_space<vmem>>, vector<8x128xf32>,
      %cst_144 = arith.constant 0.000000e+00 : f32
      %335 = vector.broadcast %cst_144 : f32 to vector<8x128xf32>
      %c0_145 = arith.constant 0 : index
      %c0_146 = arith.constant 0 : index
      %336 = vector.load %arg8[%c0_145, %c0_146] : memref<8x128xf32, #tpu.memory_space<vmem>>, vector<8x128xf32>
      tpu.vector_store %arg8[%c0_145, %c0_146], %335 {strides = array<i32>} : memref<8x128xf32, #tpu.memory_space<vmem>>, vector<8x128xf32>,
    } else {
    }
    %c0 = arith.constant 0 : index
    %c0_1 = arith.constant 0 : index
    %3 = vector.load %arg2[%c0, %c0_1] : memref<128x512xbf16, #tpu.memory_space<vmem>>, vector<128x512xbf16>
    %c0_2 = arith.constant 0 : index
    %c0_3 = arith.constant 0 : index
    %4 = vector.load %arg3[%c0_2, %c0_3] : memref<128x512xbf16, #tpu.memory_space<vmem>>, vector<128x512xbf16>
    %c0_4 = arith.constant 0 : index
    %c0_5 = arith.constant 0 : index
    %5 = vector.load %arg4[%c0_4, %c0_5] : memref<1x512xf32, #tpu.memory_space<vmem>>, vector<1x512xf32>
    %c0_6 = arith.constant 0 : index
    %c0_7 = arith.constant 0 : index
    %c0_8 = arith.constant 0 : index
    %6 = vector.load %arg1[%c0_6, %c0_7, %c0_8] : memref<8x8x128xbf16, #tpu.memory_space<vmem>>, vector<8x8x128xbf16>
    %7 = vector.shape_cast %6 : vector<8x8x128xbf16> to vector<64x128xbf16>
    %cst = arith.constant dense<0.000000e+00> : vector<64x512xf32>
    %8 = tpu.matmul %7, %3, %cst {dimension_numbers = #tpu.dot_dimension_numbers<[1], [0], [0], [1], [0, 0, 1, 1], [], []>} : vector<64x128xbf16>, vector<128x512xbf16>, vector<64x512xf32> -> vector<64x512xf32>
    %9 = vector.broadcast %5 : vector<1x512xf32> to vector<64x512xf32>
    %10 = arith.addf %8, %9 : vector<64x512xf32>
    %11 = vector.shape_cast %10 : vector<64x512xf32> to vector<8x8x512xf32>
    %c0_9 = arith.constant 0 : index
    %c0_10 = arith.constant 0 : index
    %c0_11 = arith.constant 0 : index
    %12 = vector.load %arg6[%c0_9, %c0_10, %c0_11] : memref<8x8x512xf32, #tpu.memory_space<vmem>>, vector<8x8x512xf32>
    tpu.vector_store %arg6[%c0_9, %c0_10, %c0_11], %11 {strides = array<i32>} : memref<8x8x512xf32, #tpu.memory_space<vmem>>, vector<8x8x512xf32>,
    %c0_i32_12 = arith.constant 0 : i32
    %13 = arith.index_cast %c0_i32_12 : i32 to index
    %c0_13 = arith.constant 0 : index
    %c0_14 = arith.constant 0 : index
    %14 = vector.load %arg6[%13, %c0_13, %c0_14] : memref<8x8x512xf32, #tpu.memory_space<vmem>>, vector<1x8x512xf32>
    %15 = vector.shape_cast %14 : vector<1x8x512xf32> to vector<8x512xf32>
    %c0_15 = arith.constant 0 : index
    %c0_16 = arith.constant 0 : index
    %16 = vector.load %arg7[%c0_15, %c0_16] : memref<8x128xf32, #tpu.memory_space<vmem>>, vector<8x128xf32>
    %17 = arith.truncf %16 : vector<8x128xf32> to vector<8x128xbf16>
    %cst_17 = arith.constant dense<0.000000e+00> : vector<8x512xf32>
    %18 = tpu.matmul %17, %4, %cst_17 {dimension_numbers = #tpu.dot_dimension_numbers<[1], [0], [0], [1], [0, 0, 1, 1], [], []>} : vector<8x128xbf16>, vector<128x512xbf16>, vector<8x512xf32> -> vector<8x512xf32>
    %19 = arith.addf %15, %18 : vector<8x512xf32>
    %20 = vector.extract_strided_slice %19 {offsets = [0, 0], sizes = [8, 128], strides = [1, 1]} : vector<8x512xf32> to vector<8x128xf32>
    %21 = arith.negf %20 : vector<8x128xf32>
    %22 = math.exp %21 : vector<8x128xf32>
    %cst_18 = arith.constant 1.000000e+00 : f32
    %23 = vector.broadcast %cst_18 : f32 to vector<8x128xf32>
    %24 = arith.addf %23, %22 : vector<8x128xf32>
    %25 = arith.divf %23, %24 : vector<8x128xf32>
    %26 = vector.extract_strided_slice %19 {offsets = [0, 128], sizes = [8, 128], strides = [1, 1]} : vector<8x512xf32> to vector<8x128xf32>
    %27 = arith.negf %26 : vector<8x128xf32>
    %28 = math.exp %27 : vector<8x128xf32>
    %cst_19 = arith.constant 1.000000e+00 : f32
    %29 = vector.broadcast %cst_19 : f32 to vector<8x128xf32>
    %30 = arith.addf %29, %28 : vector<8x128xf32>
    %31 = arith.divf %29, %30 : vector<8x128xf32>
    %32 = vector.extract_strided_slice %19 {offsets = [0, 256], sizes = [8, 128], strides = [1, 1]} : vector<8x512xf32> to vector<8x128xf32>
    %33 = math.tanh %32 : vector<8x128xf32>
    %34 = vector.extract_strided_slice %19 {offsets = [0, 384], sizes = [8, 128], strides = [1, 1]} : vector<8x512xf32> to vector<8x128xf32>
    %35 = arith.negf %34 : vector<8x128xf32>
    %36 = math.exp %35 : vector<8x128xf32>
    %cst_20 = arith.constant 1.000000e+00 : f32
    %37 = vector.broadcast %cst_20 : f32 to vector<8x128xf32>
    %38 = arith.addf %37, %36 : vector<8x128xf32>
    %39 = arith.divf %37, %38 : vector<8x128xf32>
    %c0_21 = arith.constant 0 : index
    %c0_22 = arith.constant 0 : index
    %40 = vector.load %arg8[%c0_21, %c0_22] : memref<8x128xf32, #tpu.memory_space<vmem>>, vector<8x128xf32>
    %41 = arith.mulf %31, %40 : vector<8x128xf32>
    %42 = arith.mulf %25, %33 : vector<8x128xf32>
    %43 = arith.addf %41, %42 : vector<8x128xf32>
    %44 = math.tanh %43 : vector<8x128xf32>
    %45 = arith.mulf %39, %44 : vector<8x128xf32>
    %c0_23 = arith.constant 0 : index
    %c0_24 = arith.constant 0 : index
    %46 = vector.load %arg8[%c0_23, %c0_24] : memref<8x128xf32, #tpu.memory_space<vmem>>, vector<8x128xf32>
    tpu.vector_store %arg8[%c0_23, %c0_24], %43 {strides = array<i32>} : memref<8x128xf32, #tpu.memory_space<vmem>>, vector<8x128xf32>,
    %c0_25 = arith.constant 0 : index
    %c0_26 = arith.constant 0 : index
    %47 = vector.load %arg7[%c0_25, %c0_26] : memref<8x128xf32, #tpu.memory_space<vmem>>, vector<8x128xf32>
    tpu.vector_store %arg7[%c0_25, %c0_26], %45 {strides = array<i32>} : memref<8x128xf32, #tpu.memory_space<vmem>>, vector<8x128xf32>,
    %48 = arith.truncf %45 : vector<8x128xf32> to vector<8x128xbf16>
    %49 = arith.index_cast %c0_i32_12 : i32 to index
    %c0_27 = arith.constant 0 : index
    %c0_28 = arith.constant 0 : index
    %50 = vector.load %arg5[%49, %c0_27, %c0_28] : memref<8x8x128xbf16, #tpu.memory_space<vmem>>, vector<1x8x128xbf16>
    %51 = vector.shape_cast %50 : vector<1x8x128xbf16> to vector<8x128xbf16>
    %52 = vector.shape_cast %48 : vector<8x128xbf16> to vector<1x8x128xbf16>
    tpu.vector_store %arg5[%49, %c0_27, %c0_28], %52 {strides = array<i32>} : memref<8x8x128xbf16, #tpu.memory_space<vmem>>, vector<1x8x128xbf16>,
    %c1_i32 = arith.constant 1 : i32
    %53 = arith.index_cast %c1_i32 : i32 to index
    %c0_29 = arith.constant 0 : index
    %c0_30 = arith.constant 0 : index
    %54 = vector.load %arg6[%53, %c0_29, %c0_30] : memref<8x8x512xf32, #tpu.memory_space<vmem>>, vector<1x8x512xf32>
    %55 = vector.shape_cast %54 : vector<1x8x512xf32> to vector<8x512xf32>
    %c0_31 = arith.constant 0 : index
    %c0_32 = arith.constant 0 : index
    %56 = vector.load %arg7[%c0_31, %c0_32] : memref<8x128xf32, #tpu.memory_space<vmem>>, vector<8x128xf32>
    %57 = arith.truncf %56 : vector<8x128xf32> to vector<8x128xbf16>
    %cst_33 = arith.constant dense<0.000000e+00> : vector<8x512xf32>
    %58 = tpu.matmul %57, %4, %cst_33 {dimension_numbers = #tpu.dot_dimension_numbers<[1], [0], [0], [1], [0, 0, 1, 1], [], []>} : vector<8x128xbf16>, vector<128x512xbf16>, vector<8x512xf32> -> vector<8x512xf32>
    %59 = arith.addf %55, %58 : vector<8x512xf32>
    %60 = vector.extract_strided_slice %59 {offsets = [0, 0], sizes = [8, 128], strides = [1, 1]} : vector<8x512xf32> to vector<8x128xf32>
    %61 = arith.negf %60 : vector<8x128xf32>
    %62 = math.exp %61 : vector<8x128xf32>
    %cst_34 = arith.constant 1.000000e+00 : f32
    %63 = vector.broadcast %cst_34 : f32 to vector<8x128xf32>
    %64 = arith.addf %63, %62 : vector<8x128xf32>
    %65 = arith.divf %63, %64 : vector<8x128xf32>
    %66 = vector.extract_strided_slice %59 {offsets = [0, 128], sizes = [8, 128], strides = [1, 1]} : vector<8x512xf32> to vector<8x128xf32>
    %67 = arith.negf %66 : vector<8x128xf32>
    %68 = math.exp %67 : vector<8x128xf32>
    %cst_35 = arith.constant 1.000000e+00 : f32
    %69 = vector.broadcast %cst_35 : f32 to vector<8x128xf32>
    %70 = arith.addf %69, %68 : vector<8x128xf32>
    %71 = arith.divf %69, %70 : vector<8x128xf32>
    %72 = vector.extract_strided_slice %59 {offsets = [0, 256], sizes = [8, 128], strides = [1, 1]} : vector<8x512xf32> to vector<8x128xf32>
    %73 = math.tanh %72 : vector<8x128xf32>
    %74 = vector.extract_strided_slice %59 {offsets = [0, 384], sizes = [8, 128], strides = [1, 1]} : vector<8x512xf32> to vector<8x128xf32>
    %75 = arith.negf %74 : vector<8x128xf32>
    %76 = math.exp %75 : vector<8x128xf32>
    %cst_36 = arith.constant 1.000000e+00 : f32
    %77 = vector.broadcast %cst_36 : f32 to vector<8x128xf32>
    %78 = arith.addf %77, %76 : vector<8x128xf32>
    %79 = arith.divf %77, %78 : vector<8x128xf32>
    %c0_37 = arith.constant 0 : index
    %c0_38 = arith.constant 0 : index
    %80 = vector.load %arg8[%c0_37, %c0_38] : memref<8x128xf32, #tpu.memory_space<vmem>>, vector<8x128xf32>
    %81 = arith.mulf %71, %80 : vector<8x128xf32>
    %82 = arith.mulf %65, %73 : vector<8x128xf32>
    %83 = arith.addf %81, %82 : vector<8x128xf32>
    %84 = math.tanh %83 : vector<8x128xf32>
    %85 = arith.mulf %79, %84 : vector<8x128xf32>
    %c0_39 = arith.constant 0 : index
    %c0_40 = arith.constant 0 : index
    %86 = vector.load %arg8[%c0_39, %c0_40] : memref<8x128xf32, #tpu.memory_space<vmem>>, vector<8x128xf32>
    tpu.vector_store %arg8[%c0_39, %c0_40], %83 {strides = array<i32>} : memref<8x128xf32, #tpu.memory_space<vmem>>, vector<8x128xf32>,
    %c0_41 = arith.constant 0 : index
    %c0_42 = arith.constant 0 : index
    %87 = vector.load %arg7[%c0_41, %c0_42] : memref<8x128xf32, #tpu.memory_space<vmem>>, vector<8x128xf32>
    tpu.vector_store %arg7[%c0_41, %c0_42], %85 {strides = array<i32>} : memref<8x128xf32, #tpu.memory_space<vmem>>, vector<8x128xf32>,
    %88 = arith.truncf %85 : vector<8x128xf32> to vector<8x128xbf16>
    %89 = arith.index_cast %c1_i32 : i32 to index
    %c0_43 = arith.constant 0 : index
    %c0_44 = arith.constant 0 : index
    %90 = vector.load %arg5[%89, %c0_43, %c0_44] : memref<8x8x128xbf16, #tpu.memory_space<vmem>>, vector<1x8x128xbf16>
    %91 = vector.shape_cast %90 : vector<1x8x128xbf16> to vector<8x128xbf16>
    %92 = vector.shape_cast %88 : vector<8x128xbf16> to vector<1x8x128xbf16>
    tpu.vector_store %arg5[%89, %c0_43, %c0_44], %92 {strides = array<i32>} : memref<8x8x128xbf16, #tpu.memory_space<vmem>>, vector<1x8x128xbf16>,
    %c2_i32 = arith.constant 2 : i32
    %93 = arith.index_cast %c2_i32 : i32 to index
    %c0_45 = arith.constant 0 : index
    %c0_46 = arith.constant 0 : index
    %94 = vector.load %arg6[%93, %c0_45, %c0_46] : memref<8x8x512xf32, #tpu.memory_space<vmem>>, vector<1x8x512xf32>
    %95 = vector.shape_cast %94 : vector<1x8x512xf32> to vector<8x512xf32>
    %c0_47 = arith.constant 0 : index
    %c0_48 = arith.constant 0 : index
    %96 = vector.load %arg7[%c0_47, %c0_48] : memref<8x128xf32, #tpu.memory_space<vmem>>, vector<8x128xf32>
    %97 = arith.truncf %96 : vector<8x128xf32> to vector<8x128xbf16>
    %cst_49 = arith.constant dense<0.000000e+00> : vector<8x512xf32>
    %98 = tpu.matmul %97, %4, %cst_49 {dimension_numbers = #tpu.dot_dimension_numbers<[1], [0], [0], [1], [0, 0, 1, 1], [], []>} : vector<8x128xbf16>, vector<128x512xbf16>, vector<8x512xf32> -> vector<8x512xf32>
    %99 = arith.addf %95, %98 : vector<8x512xf32>
    %100 = vector.extract_strided_slice %99 {offsets = [0, 0], sizes = [8, 128], strides = [1, 1]} : vector<8x512xf32> to vector<8x128xf32>
    %101 = arith.negf %100 : vector<8x128xf32>
    %102 = math.exp %101 : vector<8x128xf32>
    %cst_50 = arith.constant 1.000000e+00 : f32
    %103 = vector.broadcast %cst_50 : f32 to vector<8x128xf32>
    %104 = arith.addf %103, %102 : vector<8x128xf32>
    %105 = arith.divf %103, %104 : vector<8x128xf32>
    %106 = vector.extract_strided_slice %99 {offsets = [0, 128], sizes = [8, 128], strides = [1, 1]} : vector<8x512xf32> to vector<8x128xf32>
    %107 = arith.negf %106 : vector<8x128xf32>
    %108 = math.exp %107 : vector<8x128xf32>
    %cst_51 = arith.constant 1.000000e+00 : f32
    %109 = vector.broadcast %cst_51 : f32 to vector<8x128xf32>
    %110 = arith.addf %109, %108 : vector<8x128xf32>
    %111 = arith.divf %109, %110 : vector<8x128xf32>
    %112 = vector.extract_strided_slice %99 {offsets = [0, 256], sizes = [8, 128], strides = [1, 1]} : vector<8x512xf32> to vector<8x128xf32>
    %113 = math.tanh %112 : vector<8x128xf32>
    %114 = vector.extract_strided_slice %99 {offsets = [0, 384], sizes = [8, 128], strides = [1, 1]} : vector<8x512xf32> to vector<8x128xf32>
    %115 = arith.negf %114 : vector<8x128xf32>
    %116 = math.exp %115 : vector<8x128xf32>
    %cst_52 = arith.constant 1.000000e+00 : f32
    %117 = vector.broadcast %cst_52 : f32 to vector<8x128xf32>
    %118 = arith.addf %117, %116 : vector<8x128xf32>
    %119 = arith.divf %117, %118 : vector<8x128xf32>
    %c0_53 = arith.constant 0 : index
    %c0_54 = arith.constant 0 : index
    %120 = vector.load %arg8[%c0_53, %c0_54] : memref<8x128xf32, #tpu.memory_space<vmem>>, vector<8x128xf32>
    %121 = arith.mulf %111, %120 : vector<8x128xf32>
    %122 = arith.mulf %105, %113 : vector<8x128xf32>
    %123 = arith.addf %121, %122 : vector<8x128xf32>
    %124 = math.tanh %123 : vector<8x128xf32>
    %125 = arith.mulf %119, %124 : vector<8x128xf32>
    %c0_55 = arith.constant 0 : index
    %c0_56 = arith.constant 0 : index
    %126 = vector.load %arg8[%c0_55, %c0_56] : memref<8x128xf32, #tpu.memory_space<vmem>>, vector<8x128xf32>
    tpu.vector_store %arg8[%c0_55, %c0_56], %123 {strides = array<i32>} : memref<8x128xf32, #tpu.memory_space<vmem>>, vector<8x128xf32>,
    %c0_57 = arith.constant 0 : index
    %c0_58 = arith.constant 0 : index
    %127 = vector.load %arg7[%c0_57, %c0_58] : memref<8x128xf32, #tpu.memory_space<vmem>>, vector<8x128xf32>
    tpu.vector_store %arg7[%c0_57, %c0_58], %125 {strides = array<i32>} : memref<8x128xf32, #tpu.memory_space<vmem>>, vector<8x128xf32>,
    %128 = arith.truncf %125 : vector<8x128xf32> to vector<8x128xbf16>
    %129 = arith.index_cast %c2_i32 : i32 to index
    %c0_59 = arith.constant 0 : index
    %c0_60 = arith.constant 0 : index
    %130 = vector.load %arg5[%129, %c0_59, %c0_60] : memref<8x8x128xbf16, #tpu.memory_space<vmem>>, vector<1x8x128xbf16>
    %131 = vector.shape_cast %130 : vector<1x8x128xbf16> to vector<8x128xbf16>
    %132 = vector.shape_cast %128 : vector<8x128xbf16> to vector<1x8x128xbf16>
    tpu.vector_store %arg5[%129, %c0_59, %c0_60], %132 {strides = array<i32>} : memref<8x8x128xbf16, #tpu.memory_space<vmem>>, vector<1x8x128xbf16>,
    %c3_i32 = arith.constant 3 : i32
    %133 = arith.index_cast %c3_i32 : i32 to index
    %c0_61 = arith.constant 0 : index
    %c0_62 = arith.constant 0 : index
    %134 = vector.load %arg6[%133, %c0_61, %c0_62] : memref<8x8x512xf32, #tpu.memory_space<vmem>>, vector<1x8x512xf32>
    %135 = vector.shape_cast %134 : vector<1x8x512xf32> to vector<8x512xf32>
    %c0_63 = arith.constant 0 : index
    %c0_64 = arith.constant 0 : index
    %136 = vector.load %arg7[%c0_63, %c0_64] : memref<8x128xf32, #tpu.memory_space<vmem>>, vector<8x128xf32>
    %137 = arith.truncf %136 : vector<8x128xf32> to vector<8x128xbf16>
    %cst_65 = arith.constant dense<0.000000e+00> : vector<8x512xf32>
    %138 = tpu.matmul %137, %4, %cst_65 {dimension_numbers = #tpu.dot_dimension_numbers<[1], [0], [0], [1], [0, 0, 1, 1], [], []>} : vector<8x128xbf16>, vector<128x512xbf16>, vector<8x512xf32> -> vector<8x512xf32>
    %139 = arith.addf %135, %138 : vector<8x512xf32>
    %140 = vector.extract_strided_slice %139 {offsets = [0, 0], sizes = [8, 128], strides = [1, 1]} : vector<8x512xf32> to vector<8x128xf32>
    %141 = arith.negf %140 : vector<8x128xf32>
    %142 = math.exp %141 : vector<8x128xf32>
    %cst_66 = arith.constant 1.000000e+00 : f32
    %143 = vector.broadcast %cst_66 : f32 to vector<8x128xf32>
    %144 = arith.addf %143, %142 : vector<8x128xf32>
    %145 = arith.divf %143, %144 : vector<8x128xf32>
    %146 = vector.extract_strided_slice %139 {offsets = [0, 128], sizes = [8, 128], strides = [1, 1]} : vector<8x512xf32> to vector<8x128xf32>
    %147 = arith.negf %146 : vector<8x128xf32>
    %148 = math.exp %147 : vector<8x128xf32>
    %cst_67 = arith.constant 1.000000e+00 : f32
    %149 = vector.broadcast %cst_67 : f32 to vector<8x128xf32>
    %150 = arith.addf %149, %148 : vector<8x128xf32>
    %151 = arith.divf %149, %150 : vector<8x128xf32>
    %152 = vector.extract_strided_slice %139 {offsets = [0, 256], sizes = [8, 128], strides = [1, 1]} : vector<8x512xf32> to vector<8x128xf32>
    %153 = math.tanh %152 : vector<8x128xf32>
    %154 = vector.extract_strided_slice %139 {offsets = [0, 384], sizes = [8, 128], strides = [1, 1]} : vector<8x512xf32> to vector<8x128xf32>
    %155 = arith.negf %154 : vector<8x128xf32>
    %156 = math.exp %155 : vector<8x128xf32>
    %cst_68 = arith.constant 1.000000e+00 : f32
    %157 = vector.broadcast %cst_68 : f32 to vector<8x128xf32>
    %158 = arith.addf %157, %156 : vector<8x128xf32>
    %159 = arith.divf %157, %158 : vector<8x128xf32>
    %c0_69 = arith.constant 0 : index
    %c0_70 = arith.constant 0 : index
    %160 = vector.load %arg8[%c0_69, %c0_70] : memref<8x128xf32, #tpu.memory_space<vmem>>, vector<8x128xf32>
    %161 = arith.mulf %151, %160 : vector<8x128xf32>
    %162 = arith.mulf %145, %153 : vector<8x128xf32>
    %163 = arith.addf %161, %162 : vector<8x128xf32>
    %164 = math.tanh %163 : vector<8x128xf32>
    %165 = arith.mulf %159, %164 : vector<8x128xf32>
    %c0_71 = arith.constant 0 : index
    %c0_72 = arith.constant 0 : index
    %166 = vector.load %arg8[%c0_71, %c0_72] : memref<8x128xf32, #tpu.memory_space<vmem>>, vector<8x128xf32>
    tpu.vector_store %arg8[%c0_71, %c0_72], %163 {strides = array<i32>} : memref<8x128xf32, #tpu.memory_space<vmem>>, vector<8x128xf32>,
    %c0_73 = arith.constant 0 : index
    %c0_74 = arith.constant 0 : index
    %167 = vector.load %arg7[%c0_73, %c0_74] : memref<8x128xf32, #tpu.memory_space<vmem>>, vector<8x128xf32>
    tpu.vector_store %arg7[%c0_73, %c0_74], %165 {strides = array<i32>} : memref<8x128xf32, #tpu.memory_space<vmem>>, vector<8x128xf32>,
    %168 = arith.truncf %165 : vector<8x128xf32> to vector<8x128xbf16>
    %169 = arith.index_cast %c3_i32 : i32 to index
    %c0_75 = arith.constant 0 : index
    %c0_76 = arith.constant 0 : index
    %170 = vector.load %arg5[%169, %c0_75, %c0_76] : memref<8x8x128xbf16, #tpu.memory_space<vmem>>, vector<1x8x128xbf16>
    %171 = vector.shape_cast %170 : vector<1x8x128xbf16> to vector<8x128xbf16>
    %172 = vector.shape_cast %168 : vector<8x128xbf16> to vector<1x8x128xbf16>
    tpu.vector_store %arg5[%169, %c0_75, %c0_76], %172 {strides = array<i32>} : memref<8x8x128xbf16, #tpu.memory_space<vmem>>, vector<1x8x128xbf16>,
    %c4_i32 = arith.constant 4 : i32
    %173 = arith.index_cast %c4_i32 : i32 to index
    %c0_77 = arith.constant 0 : index
    %c0_78 = arith.constant 0 : index
    %174 = vector.load %arg6[%173, %c0_77, %c0_78] : memref<8x8x512xf32, #tpu.memory_space<vmem>>, vector<1x8x512xf32>
    %175 = vector.shape_cast %174 : vector<1x8x512xf32> to vector<8x512xf32>
    %c0_79 = arith.constant 0 : index
    %c0_80 = arith.constant 0 : index
    %176 = vector.load %arg7[%c0_79, %c0_80] : memref<8x128xf32, #tpu.memory_space<vmem>>, vector<8x128xf32>
    %177 = arith.truncf %176 : vector<8x128xf32> to vector<8x128xbf16>
    %cst_81 = arith.constant dense<0.000000e+00> : vector<8x512xf32>
    %178 = tpu.matmul %177, %4, %cst_81 {dimension_numbers = #tpu.dot_dimension_numbers<[1], [0], [0], [1], [0, 0, 1, 1], [], []>} : vector<8x128xbf16>, vector<128x512xbf16>, vector<8x512xf32> -> vector<8x512xf32>
    %179 = arith.addf %175, %178 : vector<8x512xf32>
    %180 = vector.extract_strided_slice %179 {offsets = [0, 0], sizes = [8, 128], strides = [1, 1]} : vector<8x512xf32> to vector<8x128xf32>
    %181 = arith.negf %180 : vector<8x128xf32>
    %182 = math.exp %181 : vector<8x128xf32>
    %cst_82 = arith.constant 1.000000e+00 : f32
    %183 = vector.broadcast %cst_82 : f32 to vector<8x128xf32>
    %184 = arith.addf %183, %182 : vector<8x128xf32>
    %185 = arith.divf %183, %184 : vector<8x128xf32>
    %186 = vector.extract_strided_slice %179 {offsets = [0, 128], sizes = [8, 128], strides = [1, 1]} : vector<8x512xf32> to vector<8x128xf32>
    %187 = arith.negf %186 : vector<8x128xf32>
    %188 = math.exp %187 : vector<8x128xf32>
    %cst_83 = arith.constant 1.000000e+00 : f32
    %189 = vector.broadcast %cst_83 : f32 to vector<8x128xf32>
    %190 = arith.addf %189, %188 : vector<8x128xf32>
    %191 = arith.divf %189, %190 : vector<8x128xf32>
    %192 = vector.extract_strided_slice %179 {offsets = [0, 256], sizes = [8, 128], strides = [1, 1]} : vector<8x512xf32> to vector<8x128xf32>
    %193 = math.tanh %192 : vector<8x128xf32>
    %194 = vector.extract_strided_slice %179 {offsets = [0, 384], sizes = [8, 128], strides = [1, 1]} : vector<8x512xf32> to vector<8x128xf32>
    %195 = arith.negf %194 : vector<8x128xf32>
    %196 = math.exp %195 : vector<8x128xf32>
    %cst_84 = arith.constant 1.000000e+00 : f32
    %197 = vector.broadcast %cst_84 : f32 to vector<8x128xf32>
    %198 = arith.addf %197, %196 : vector<8x128xf32>
    %199 = arith.divf %197, %198 : vector<8x128xf32>
    %c0_85 = arith.constant 0 : index
    %c0_86 = arith.constant 0 : index
    %200 = vector.load %arg8[%c0_85, %c0_86] : memref<8x128xf32, #tpu.memory_space<vmem>>, vector<8x128xf32>
    %201 = arith.mulf %191, %200 : vector<8x128xf32>
    %202 = arith.mulf %185, %193 : vector<8x128xf32>
    %203 = arith.addf %201, %202 : vector<8x128xf32>
    %204 = math.tanh %203 : vector<8x128xf32>
    %205 = arith.mulf %199, %204 : vector<8x128xf32>
    %c0_87 = arith.constant 0 : index
    %c0_88 = arith.constant 0 : index
    %206 = vector.load %arg8[%c0_87, %c0_88] : memref<8x128xf32, #tpu.memory_space<vmem>>, vector<8x128xf32>
    tpu.vector_store %arg8[%c0_87, %c0_88], %203 {strides = array<i32>} : memref<8x128xf32, #tpu.memory_space<vmem>>, vector<8x128xf32>,
    %c0_89 = arith.constant 0 : index
    %c0_90 = arith.constant 0 : index
    %207 = vector.load %arg7[%c0_89, %c0_90] : memref<8x128xf32, #tpu.memory_space<vmem>>, vector<8x128xf32>
    tpu.vector_store %arg7[%c0_89, %c0_90], %205 {strides = array<i32>} : memref<8x128xf32, #tpu.memory_space<vmem>>, vector<8x128xf32>,
    %208 = arith.truncf %205 : vector<8x128xf32> to vector<8x128xbf16>
    %209 = arith.index_cast %c4_i32 : i32 to index
    %c0_91 = arith.constant 0 : index
    %c0_92 = arith.constant 0 : index
    %210 = vector.load %arg5[%209, %c0_91, %c0_92] : memref<8x8x128xbf16, #tpu.memory_space<vmem>>, vector<1x8x128xbf16>
    %211 = vector.shape_cast %210 : vector<1x8x128xbf16> to vector<8x128xbf16>
    %212 = vector.shape_cast %208 : vector<8x128xbf16> to vector<1x8x128xbf16>
    tpu.vector_store %arg5[%209, %c0_91, %c0_92], %212 {strides = array<i32>} : memref<8x8x128xbf16, #tpu.memory_space<vmem>>, vector<1x8x128xbf16>,
    %c5_i32 = arith.constant 5 : i32
    %213 = arith.index_cast %c5_i32 : i32 to index
    %c0_93 = arith.constant 0 : index
    %c0_94 = arith.constant 0 : index
    %214 = vector.load %arg6[%213, %c0_93, %c0_94] : memref<8x8x512xf32, #tpu.memory_space<vmem>>, vector<1x8x512xf32>
    %215 = vector.shape_cast %214 : vector<1x8x512xf32> to vector<8x512xf32>
    %c0_95 = arith.constant 0 : index
    %c0_96 = arith.constant 0 : index
    %216 = vector.load %arg7[%c0_95, %c0_96] : memref<8x128xf32, #tpu.memory_space<vmem>>, vector<8x128xf32>
    %217 = arith.truncf %216 : vector<8x128xf32> to vector<8x128xbf16>
    %cst_97 = arith.constant dense<0.000000e+00> : vector<8x512xf32>
    %218 = tpu.matmul %217, %4, %cst_97 {dimension_numbers = #tpu.dot_dimension_numbers<[1], [0], [0], [1], [0, 0, 1, 1], [], []>} : vector<8x128xbf16>, vector<128x512xbf16>, vector<8x512xf32> -> vector<8x512xf32>
    %219 = arith.addf %215, %218 : vector<8x512xf32>
    %220 = vector.extract_strided_slice %219 {offsets = [0, 0], sizes = [8, 128], strides = [1, 1]} : vector<8x512xf32> to vector<8x128xf32>
    %221 = arith.negf %220 : vector<8x128xf32>
    %222 = math.exp %221 : vector<8x128xf32>
    %cst_98 = arith.constant 1.000000e+00 : f32
    %223 = vector.broadcast %cst_98 : f32 to vector<8x128xf32>
    %224 = arith.addf %223, %222 : vector<8x128xf32>
    %225 = arith.divf %223, %224 : vector<8x128xf32>
    %226 = vector.extract_strided_slice %219 {offsets = [0, 128], sizes = [8, 128], strides = [1, 1]} : vector<8x512xf32> to vector<8x128xf32>
    %227 = arith.negf %226 : vector<8x128xf32>
    %228 = math.exp %227 : vector<8x128xf32>
    %cst_99 = arith.constant 1.000000e+00 : f32
    %229 = vector.broadcast %cst_99 : f32 to vector<8x128xf32>
    %230 = arith.addf %229, %228 : vector<8x128xf32>
    %231 = arith.divf %229, %230 : vector<8x128xf32>
    %232 = vector.extract_strided_slice %219 {offsets = [0, 256], sizes = [8, 128], strides = [1, 1]} : vector<8x512xf32> to vector<8x128xf32>
    %233 = math.tanh %232 : vector<8x128xf32>
    %234 = vector.extract_strided_slice %219 {offsets = [0, 384], sizes = [8, 128], strides = [1, 1]} : vector<8x512xf32> to vector<8x128xf32>
    %235 = arith.negf %234 : vector<8x128xf32>
    %236 = math.exp %235 : vector<8x128xf32>
    %cst_100 = arith.constant 1.000000e+00 : f32
    %237 = vector.broadcast %cst_100 : f32 to vector<8x128xf32>
    %238 = arith.addf %237, %236 : vector<8x128xf32>
    %239 = arith.divf %237, %238 : vector<8x128xf32>
    %c0_101 = arith.constant 0 : index
    %c0_102 = arith.constant 0 : index
    %240 = vector.load %arg8[%c0_101, %c0_102] : memref<8x128xf32, #tpu.memory_space<vmem>>, vector<8x128xf32>
    %241 = arith.mulf %231, %240 : vector<8x128xf32>
    %242 = arith.mulf %225, %233 : vector<8x128xf32>
    %243 = arith.addf %241, %242 : vector<8x128xf32>
    %244 = math.tanh %243 : vector<8x128xf32>
    %245 = arith.mulf %239, %244 : vector<8x128xf32>
    %c0_103 = arith.constant 0 : index
    %c0_104 = arith.constant 0 : index
    %246 = vector.load %arg8[%c0_103, %c0_104] : memref<8x128xf32, #tpu.memory_space<vmem>>, vector<8x128xf32>
    tpu.vector_store %arg8[%c0_103, %c0_104], %243 {strides = array<i32>} : memref<8x128xf32, #tpu.memory_space<vmem>>, vector<8x128xf32>,
    %c0_105 = arith.constant 0 : index
    %c0_106 = arith.constant 0 : index
    %247 = vector.load %arg7[%c0_105, %c0_106] : memref<8x128xf32, #tpu.memory_space<vmem>>, vector<8x128xf32>
    tpu.vector_store %arg7[%c0_105, %c0_106], %245 {strides = array<i32>} : memref<8x128xf32, #tpu.memory_space<vmem>>, vector<8x128xf32>,
    %248 = arith.truncf %245 : vector<8x128xf32> to vector<8x128xbf16>
    %249 = arith.index_cast %c5_i32 : i32 to index
    %c0_107 = arith.constant 0 : index
    %c0_108 = arith.constant 0 : index
    %250 = vector.load %arg5[%249, %c0_107, %c0_108] : memref<8x8x128xbf16, #tpu.memory_space<vmem>>, vector<1x8x128xbf16>
    %251 = vector.shape_cast %250 : vector<1x8x128xbf16> to vector<8x128xbf16>
    %252 = vector.shape_cast %248 : vector<8x128xbf16> to vector<1x8x128xbf16>
    tpu.vector_store %arg5[%249, %c0_107, %c0_108], %252 {strides = array<i32>} : memref<8x8x128xbf16, #tpu.memory_space<vmem>>, vector<1x8x128xbf16>,
    %c6_i32 = arith.constant 6 : i32
    %253 = arith.index_cast %c6_i32 : i32 to index
    %c0_109 = arith.constant 0 : index
    %c0_110 = arith.constant 0 : index
    %254 = vector.load %arg6[%253, %c0_109, %c0_110] : memref<8x8x512xf32, #tpu.memory_space<vmem>>, vector<1x8x512xf32>
    %255 = vector.shape_cast %254 : vector<1x8x512xf32> to vector<8x512xf32>
    %c0_111 = arith.constant 0 : index
    %c0_112 = arith.constant 0 : index
    %256 = vector.load %arg7[%c0_111, %c0_112] : memref<8x128xf32, #tpu.memory_space<vmem>>, vector<8x128xf32>
    %257 = arith.truncf %256 : vector<8x128xf32> to vector<8x128xbf16>
    %cst_113 = arith.constant dense<0.000000e+00> : vector<8x512xf32>
    %258 = tpu.matmul %257, %4, %cst_113 {dimension_numbers = #tpu.dot_dimension_numbers<[1], [0], [0], [1], [0, 0, 1, 1], [], []>} : vector<8x128xbf16>, vector<128x512xbf16>, vector<8x512xf32> -> vector<8x512xf32>
    %259 = arith.addf %255, %258 : vector<8x512xf32>
    %260 = vector.extract_strided_slice %259 {offsets = [0, 0], sizes = [8, 128], strides = [1, 1]} : vector<8x512xf32> to vector<8x128xf32>
    %261 = arith.negf %260 : vector<8x128xf32>
    %262 = math.exp %261 : vector<8x128xf32>
    %cst_114 = arith.constant 1.000000e+00 : f32
    %263 = vector.broadcast %cst_114 : f32 to vector<8x128xf32>
    %264 = arith.addf %263, %262 : vector<8x128xf32>
    %265 = arith.divf %263, %264 : vector<8x128xf32>
    %266 = vector.extract_strided_slice %259 {offsets = [0, 128], sizes = [8, 128], strides = [1, 1]} : vector<8x512xf32> to vector<8x128xf32>
    %267 = arith.negf %266 : vector<8x128xf32>
    %268 = math.exp %267 : vector<8x128xf32>
    %cst_115 = arith.constant 1.000000e+00 : f32
    %269 = vector.broadcast %cst_115 : f32 to vector<8x128xf32>
    %270 = arith.addf %269, %268 : vector<8x128xf32>
    %271 = arith.divf %269, %270 : vector<8x128xf32>
    %272 = vector.extract_strided_slice %259 {offsets = [0, 256], sizes = [8, 128], strides = [1, 1]} : vector<8x512xf32> to vector<8x128xf32>
    %273 = math.tanh %272 : vector<8x128xf32>
    %274 = vector.extract_strided_slice %259 {offsets = [0, 384], sizes = [8, 128], strides = [1, 1]} : vector<8x512xf32> to vector<8x128xf32>
    %275 = arith.negf %274 : vector<8x128xf32>
    %276 = math.exp %275 : vector<8x128xf32>
    %cst_116 = arith.constant 1.000000e+00 : f32
    %277 = vector.broadcast %cst_116 : f32 to vector<8x128xf32>
    %278 = arith.addf %277, %276 : vector<8x128xf32>
    %279 = arith.divf %277, %278 : vector<8x128xf32>
    %c0_117 = arith.constant 0 : index
    %c0_118 = arith.constant 0 : index
    %280 = vector.load %arg8[%c0_117, %c0_118] : memref<8x128xf32, #tpu.memory_space<vmem>>, vector<8x128xf32>
    %281 = arith.mulf %271, %280 : vector<8x128xf32>
    %282 = arith.mulf %265, %273 : vector<8x128xf32>
    %283 = arith.addf %281, %282 : vector<8x128xf32>
    %284 = math.tanh %283 : vector<8x128xf32>
    %285 = arith.mulf %279, %284 : vector<8x128xf32>
    %c0_119 = arith.constant 0 : index
    %c0_120 = arith.constant 0 : index
    %286 = vector.load %arg8[%c0_119, %c0_120] : memref<8x128xf32, #tpu.memory_space<vmem>>, vector<8x128xf32>
    tpu.vector_store %arg8[%c0_119, %c0_120], %283 {strides = array<i32>} : memref<8x128xf32, #tpu.memory_space<vmem>>, vector<8x128xf32>,
    %c0_121 = arith.constant 0 : index
    %c0_122 = arith.constant 0 : index
    %287 = vector.load %arg7[%c0_121, %c0_122] : memref<8x128xf32, #tpu.memory_space<vmem>>, vector<8x128xf32>
    tpu.vector_store %arg7[%c0_121, %c0_122], %285 {strides = array<i32>} : memref<8x128xf32, #tpu.memory_space<vmem>>, vector<8x128xf32>,
    %288 = arith.truncf %285 : vector<8x128xf32> to vector<8x128xbf16>
    %289 = arith.index_cast %c6_i32 : i32 to index
    %c0_123 = arith.constant 0 : index
    %c0_124 = arith.constant 0 : index
    %290 = vector.load %arg5[%289, %c0_123, %c0_124] : memref<8x8x128xbf16, #tpu.memory_space<vmem>>, vector<1x8x128xbf16>
    %291 = vector.shape_cast %290 : vector<1x8x128xbf16> to vector<8x128xbf16>
    %292 = vector.shape_cast %288 : vector<8x128xbf16> to vector<1x8x128xbf16>
    tpu.vector_store %arg5[%289, %c0_123, %c0_124], %292 {strides = array<i32>} : memref<8x8x128xbf16, #tpu.memory_space<vmem>>, vector<1x8x128xbf16>,
    %c7_i32 = arith.constant 7 : i32
    %293 = arith.index_cast %c7_i32 : i32 to index
    %c0_125 = arith.constant 0 : index
    %c0_126 = arith.constant 0 : index
    %294 = vector.load %arg6[%293, %c0_125, %c0_126] : memref<8x8x512xf32, #tpu.memory_space<vmem>>, vector<1x8x512xf32>
    %295 = vector.shape_cast %294 : vector<1x8x512xf32> to vector<8x512xf32>
    %c0_127 = arith.constant 0 : index
    %c0_128 = arith.constant 0 : index
    %296 = vector.load %arg7[%c0_127, %c0_128] : memref<8x128xf32, #tpu.memory_space<vmem>>, vector<8x128xf32>
    %297 = arith.truncf %296 : vector<8x128xf32> to vector<8x128xbf16>
    %cst_129 = arith.constant dense<0.000000e+00> : vector<8x512xf32>
    %298 = tpu.matmul %297, %4, %cst_129 {dimension_numbers = #tpu.dot_dimension_numbers<[1], [0], [0], [1], [0, 0, 1, 1], [], []>} : vector<8x128xbf16>, vector<128x512xbf16>, vector<8x512xf32> -> vector<8x512xf32>
    %299 = arith.addf %295, %298 : vector<8x512xf32>
    %300 = vector.extract_strided_slice %299 {offsets = [0, 0], sizes = [8, 128], strides = [1, 1]} : vector<8x512xf32> to vector<8x128xf32>
    %301 = arith.negf %300 : vector<8x128xf32>
    %302 = math.exp %301 : vector<8x128xf32>
    %cst_130 = arith.constant 1.000000e+00 : f32
    %303 = vector.broadcast %cst_130 : f32 to vector<8x128xf32>
    %304 = arith.addf %303, %302 : vector<8x128xf32>
    %305 = arith.divf %303, %304 : vector<8x128xf32>
    %306 = vector.extract_strided_slice %299 {offsets = [0, 128], sizes = [8, 128], strides = [1, 1]} : vector<8x512xf32> to vector<8x128xf32>
    %307 = arith.negf %306 : vector<8x128xf32>
    %308 = math.exp %307 : vector<8x128xf32>
    %cst_131 = arith.constant 1.000000e+00 : f32
    %309 = vector.broadcast %cst_131 : f32 to vector<8x128xf32>
    %310 = arith.addf %309, %308 : vector<8x128xf32>
    %311 = arith.divf %309, %310 : vector<8x128xf32>
    %312 = vector.extract_strided_slice %299 {offsets = [0, 256], sizes = [8, 128], strides = [1, 1]} : vector<8x512xf32> to vector<8x128xf32>
    %313 = math.tanh %312 : vector<8x128xf32>
    %314 = vector.extract_strided_slice %299 {offsets = [0, 384], sizes = [8, 128], strides = [1, 1]} : vector<8x512xf32> to vector<8x128xf32>
    %315 = arith.negf %314 : vector<8x128xf32>
    %316 = math.exp %315 : vector<8x128xf32>
    %cst_132 = arith.constant 1.000000e+00 : f32
    %317 = vector.broadcast %cst_132 : f32 to vector<8x128xf32>
    %318 = arith.addf %317, %316 : vector<8x128xf32>
    %319 = arith.divf %317, %318 : vector<8x128xf32>
    %c0_133 = arith.constant 0 : index
    %c0_134 = arith.constant 0 : index
    %320 = vector.load %arg8[%c0_133, %c0_134] : memref<8x128xf32, #tpu.memory_space<vmem>>, vector<8x128xf32>
    %321 = arith.mulf %311, %320 : vector<8x128xf32>
    %322 = arith.mulf %305, %313 : vector<8x128xf32>
    %323 = arith.addf %321, %322 : vector<8x128xf32>
    %324 = math.tanh %323 : vector<8x128xf32>
    %325 = arith.mulf %319, %324 : vector<8x128xf32>
    %c0_135 = arith.constant 0 : index
    %c0_136 = arith.constant 0 : index
    %326 = vector.load %arg8[%c0_135, %c0_136] : memref<8x128xf32, #tpu.memory_space<vmem>>, vector<8x128xf32>
    tpu.vector_store %arg8[%c0_135, %c0_136], %323 {strides = array<i32>} : memref<8x128xf32, #tpu.memory_space<vmem>>, vector<8x128xf32>,
    %c0_137 = arith.constant 0 : index
    %c0_138 = arith.constant 0 : index
    %327 = vector.load %arg7[%c0_137, %c0_138] : memref<8x128xf32, #tpu.memory_space<vmem>>, vector<8x128xf32>
    tpu.vector_store %arg7[%c0_137, %c0_138], %325 {strides = array<i32>} : memref<8x128xf32, #tpu.memory_space<vmem>>, vector<8x128xf32>,
    %328 = arith.truncf %325 : vector<8x128xf32> to vector<8x128xbf16>
    %329 = arith.index_cast %c7_i32 : i32 to index
    %c0_139 = arith.constant 0 : index
    %c0_140 = arith.constant 0 : index
    %330 = vector.load %arg5[%329, %c0_139, %c0_140] : memref<8x8x128xbf16, #tpu.memory_space<vmem>>, vector<1x8x128xbf16>
    %331 = vector.shape_cast %330 : vector<1x8x128xbf16> to vector<8x128xbf16>
    %332 = vector.shape_cast %328 : vector<8x128xbf16> to vector<1x8x128xbf16>
    tpu.vector_store %arg5[%329, %c0_139, %c0_140], %332 {strides = array<i32>} : memref<8x8x128xbf16, #tpu.memory_space<vmem>>, vector<1x8x128xbf16>,
    %c8_i32 = arith.constant 8 : i32
    return
  }
  func.func @transform_0(%arg0: i32) -> (i32, i32, i32) {
    %c0_i32 = arith.constant 0 : i32
    %c0_i32_0 = arith.constant 0 : i32
    %c0_i32_1 = arith.constant 0 : i32
    return %arg0, %c0_i32, %c0_i32_0 : i32, i32, i32
  }
  func.func @transform_1(%arg0: i32) -> (i32, i32) {
    %c0_i32 = arith.constant 0 : i32
    %c0_i32_0 = arith.constant 0 : i32
    %c0_i32_1 = arith.constant 0 : i32
    return %c0_i32, %c0_i32_0 : i32, i32
  }
  func.func @transform_2(%arg0: i32) -> (i32, i32) {
    %c0_i32 = arith.constant 0 : i32
    %c0_i32_0 = arith.constant 0 : i32
    %c0_i32_1 = arith.constant 0 : i32
    return %c0_i32, %c0_i32_0 : i32, i32
  }
  func.func @transform_3(%arg0: i32) -> (i32, i32) {
    %c0_i32 = arith.constant 0 : i32
    %c0_i32_0 = arith.constant 0 : i32
    %c0_i32_1 = arith.constant 0 : i32
    return %c0_i32, %c0_i32_0 : i32, i32
  }
  func.func @transform_4(%arg0: i32) -> (i32, i32, i32) {
    %c0_i32 = arith.constant 0 : i32
    %c0_i32_0 = arith.constant 0 : i32
    %c0_i32_1 = arith.constant 0 : i32
    return %arg0, %c0_i32, %c0_i32_0 : i32, i32, i32
  }
}

</mosaic_0001>

<llo_original>
// kernel: decoder_rnn_forward.3
$region0: #{decoder_rnn_forward.3}
  #allocation0 [shape = 'u32[]', space=smem, size = 0x4, offset = 0x4, fixed_abs, tag = 'smem constant byte address 0x4 - core index']
  #allocation1 [shape = 'u32[144,128]{1,0:T(1,128)}', space=vmem, size = 0x12000, scoped, tag = 'internal scratch']
  #allocation2 [shape = 'f32[64,128]{1,0:T(8,128)}', space=vmem, size = 0x8000, scoped, tag = 'scratch operand']
  %s0 = inlined_call_operand.vmem [shape: bf16[64,128], index: 0, kind: input, shape index: {}]
  %s1 = inlined_call_operand.vmem [shape: bf16[128,128], index: 1, kind: input, shape index: {}]
  %s2 = inlined_call_operand.vmem [shape: f32[1,128], index: 2, kind: input, shape index: {}]
  %s3 = inlined_call_operand.vmem [shape: f32[64,128], index: 3, kind: output, shape index: {}]
  %s4 = sld [smem:[#allocation0]]
  $region30: #{decoder_rnn_forward.3} parent=0
    _
  %s6 = ssub.s32 1, %s4
  %s7 = scalar_select 0, %s6, %s4
  // Predicated region
  $region2: #{decoder_rnn_forward.3} parent=0 // pred_check
    _
  $region3: #{decoder_rnn_forward.3} parent=0 // pred_check_branch
    %9 = sbr.rel (0) target = $region5
  $region4: #{decoder_rnn_forward.3} parent=0 // pred_region
    _
  $region5: #{decoder_rnn_forward.3} parent=0 // pred_fallthru
    _
  // Predicated region
  $region6: #{decoder_rnn_forward.3} parent=0 // pred_check
    _
  $region7: #{decoder_rnn_forward.3} parent=0 // pred_check_branch
    %11 = sbr.rel (0) target = $region9
  $region8: #{decoder_rnn_forward.3} parent=0 // pred_region
    _
  $region9: #{decoder_rnn_forward.3} parent=0 // pred_fallthru
    _
  // Predicated region
  $region10: #{decoder_rnn_forward.3} parent=0 // pred_check
    _
  $region11: #{decoder_rnn_forward.3} parent=0 // pred_check_branch
    %13 = sbr.rel (0) target = $region13
  $region12: #{decoder_rnn_forward.3} parent=0 // pred_region
    _
  $region13: #{decoder_rnn_forward.3} parent=0 // pred_fallthru
    _
  %p15 = scmp.eq.s32.totalorder 0, 0
  // Predicated region
  $region14: #{decoder_rnn_forward.3} parent=0 // pred_check
    %p16 = pneg %p15
  $region15: #{decoder_rnn_forward.3} parent=0 // pred_check_branch
    %18 = sbr.rel (%p16) target = $region17
  $region16: #{decoder_rnn_forward.3} parent=0 // pred_region
    %19 = vst [vmem:[#allocation2] sm:$0xff] 0.0
    %20 = vst [vmem:[#allocation2 + $0x8] sm:$0xff] 0.0
    %21 = vst [vmem:[#allocation2 + $0x10] sm:$0xff] 0.0
    %22 = vst [vmem:[#allocation2 + $0x18] sm:$0xff] 0.0
    %23 = vst [vmem:[#allocation2 + $0x20] sm:$0xff] 0.0
    %24 = vst [vmem:[#allocation2 + $0x28] sm:$0xff] 0.0
    %25 = vst [vmem:[#allocation2 + $0x30] sm:$0xff] 0.0
    %26 = vst [vmem:[#allocation2 + $0x38] sm:$0xff] 0.0
  $region17: #{decoder_rnn_forward.3} parent=0 // pred_fallthru
    _
  %v27 = vld [vmem:[#allocation2] sm:$0xff]
  %v28 = vld [vmem:[#allocation2 + $0x8] sm:$0xff]
  %v29 = vld [vmem:[#allocation2 + $0x10] sm:$0xff]
  %v30 = vld [vmem:[#allocation2 + $0x18] sm:$0xff]
  %v31 = vld [vmem:[#allocation2 + $0x20] sm:$0xff]
  %v32 = vld [vmem:[#allocation2 + $0x28] sm:$0xff]
  %v33 = vld [vmem:[#allocation2 + $0x30] sm:$0xff]
  %v34 = vld [vmem:[#allocation2 + $0x38] sm:$0xff]
  %v35 = vld [vmem:[%s0] sm:$0xf]
  %v36 = vld [vmem:[%s0 + $0x4] sm:$0xf]
  %v37 = vld [vmem:[%s0 + $0x8] sm:$0xf]
  %v38 = vld [vmem:[%s0 + $0xc] sm:$0xf]
  %v39 = vld [vmem:[%s0 + $0x10] sm:$0xf]
  %v40 = vld [vmem:[%s0 + $0x14] sm:$0xf]
  %v41 = vld [vmem:[%s0 + $0x18] sm:$0xf]
  %v42 = vld [vmem:[%s0 + $0x1c] sm:$0xf]
  %v43 = vld [vmem:[%s1] sm:$0xf]
  %v44 = vld [vmem:[%s1 + $0x4] sm:$0xf]
  %v45 = vld [vmem:[%s1 + $0x8] sm:$0xf]
  %v46 = vld [vmem:[%s1 + $0xc] sm:$0xf]
  %v47 = vld [vmem:[%s1 + $0x10] sm:$0xf]
  %v48 = vld [vmem:[%s1 + $0x14] sm:$0xf]
  %v49 = vld [vmem:[%s1 + $0x18] sm:$0xf]
  %v50 = vld [vmem:[%s1 + $0x1c] sm:$0xf]
  %v51 = vld [vmem:[%s1 + $0x20] sm:$0xf]
  %v52 = vld [vmem:[%s1 + $0x24] sm:$0xf]
  %v53 = vld [vmem:[%s1 + $0x28] sm:$0xf]
  %v54 = vld [vmem:[%s1 + $0x2c] sm:$0xf]
  %v55 = vld [vmem:[%s1 + $0x30] sm:$0xf]
  %v56 = vld [vmem:[%s1 + $0x34] sm:$0xf]
  %v57 = vld [vmem:[%s1 + $0x38] sm:$0xf]
  %v58 = vld [vmem:[%s1 + $0x3c] sm:$0xf]
  %v67 = vunpack.c.l.b16 %v35
  %v68 = vunpack.c.l.b16 %v36
  %v69 = vunpack.c.l.b16 %v37
  %v70 = vunpack.c.l.b16 %v38
  %v71 = vunpack.c.l.b16 %v39
  %v72 = vunpack.c.l.b16 %v40
  %v73 = vunpack.c.l.b16 %v41
  %v74 = vunpack.c.l.b16 %v42
  %v75 = vpack.c.b16 %v68, %v67
  %v76 = vpack.c.b16 %v70, %v69
  %v77 = vpack.c.b16 %v72, %v71
  %v78 = vpack.c.b16 %v74, %v73
  %v99 = vunpack.c.l.b16 %v43
  %v100 = vunpack.c.l.b16 %v44
  %v101 = vunpack.c.l.b16 %v45
  %v102 = vunpack.c.l.b16 %v46
  %v103 = vunpack.c.l.b16 %v47
  %v104 = vunpack.c.l.b16 %v48
  %v105 = vunpack.c.l.b16 %v49
  %v106 = vunpack.c.l.b16 %v50
  %v107 = vunpack.c.l.b16 %v51
  %v108 = vunpack.c.l.b16 %v52
  %v109 = vunpack.c.l.b16 %v53
  %v110 = vunpack.c.l.b16 %v54
  %v111 = vunpack.c.l.b16 %v55
  %v112 = vunpack.c.l.b16 %v56
  %v113 = vunpack.c.l.b16 %v57
  %v114 = vunpack.c.l.b16 %v58
  %v115 = vpack.c.b16 %v100, %v99
  %v116 = vpack.c.b16 %v102, %v101
  %v117 = vpack.c.b16 %v104, %v103
  %v118 = vpack.c.b16 %v106, %v105
  %v119 = vpack.c.b16 %v108, %v107
  %v120 = vpack.c.b16 %v110, %v109
  %v121 = vpack.c.b16 %v112, %v111
  %v122 = vpack.c.b16 %v114, %v113
  %131 = vmatprep.subr.bf16.mxu0 0
  %132 = vmatpush1.bf16.msra.mxu0 %v122
  %133 = vmatprep.subr.bf16.mxu0 0
  %134 = vmatpush1.bf16.msra.mxu0 %v121
  %135 = vmatprep.subr.bf16.mxu0 0
  %136 = vmatpush1.bf16.msra.mxu0 %v120
  %137 = vmatprep.subr.bf16.mxu0 0
  %138 = vmatpush1.bf16.msra.mxu0 %v119
  %139 = vmatprep.subr.bf16.mxu0 0
  %140 = vmatpush1.bf16.msra.mxu0 %v118
  %141 = vmatprep.subr.bf16.mxu0 0
  %142 = vmatpush1.bf16.msra.mxu0 %v117
  %143 = vmatprep.subr.bf16.mxu0 0
  %144 = vmatpush1.bf16.msra.mxu0 %v116
  %145 = vmatprep.subr.bf16.mxu0 0
  %146 = vmatpush1.bf16.msra.mxu0 %v115
  %147 = vmatprep.subr.bf16.mxu0 0
  %148 = vmatpush2.bf16.msra.mxu0 0
  %149 = vmatprep.subr.bf16.mxu0 0
  %150 = vmatpush2.bf16.msra.mxu0 0
  %151 = vmatprep.subr.bf16.mxu0 0
  %152 = vmatpush2.bf16.msra.mxu0 0
  %153 = vmatprep.subr.bf16.mxu0 0
  %154 = vmatpush2.bf16.msra.mxu0 0
  %155 = vmatprep.subr.bf16.mxu0 0
  %156 = vmatpush2.bf16.msra.mxu0 0
  %157 = vmatprep.subr.bf16.mxu0 0
  %158 = vmatpush2.bf16.msra.mxu0 0
  %159 = vmatprep.subr.bf16.mxu0 0
  %160 = vmatpush2.bf16.msra.mxu0 0
  %161 = vmatprep.subr.bf16.mxu0 0
  %162 = vmatpush2.bf16.msra.mxu0 0
  %163 = vmatprep.mubr.bf16.mxu0 0
  %164 = vmatmul.mubr.bf16.gmra.mxu0 %v75
  %v165 = vpop.f32.mrf.mxu0
  %v166 = vadd.f32 0.0, %v165
  %v167 = vpop.f32.mrf.mxu0
  %v168 = vpop.f32.mrf.mxu0
  %v169 = vadd.f32 0.0, %v168
  %v170 = vpop.f32.mrf.mxu0
  %171 = vmatprep.mubr.bf16.mxu0 0
  %172 = vmatmul.mubr.bf16.gmra.mxu0 %v76
  %v173 = vpop.f32.mrf.mxu0
  %v174 = vadd.f32 0.0, %v173
  %v175 = vpop.f32.mrf.mxu0
  %v176 = vpop.f32.mrf.mxu0
  %v177 = vadd.f32 0.0, %v176
  %v178 = vpop.f32.mrf.mxu0
  %179 = vmatprep.mubr.bf16.mxu0 0
  %180 = vmatmul.mubr.bf16.gmra.mxu0 %v77
  %v181 = vpop.f32.mrf.mxu0
  %v182 = vadd.f32 0.0, %v181
  %v183 = vpop.f32.mrf.mxu0
  %v184 = vpop.f32.mrf.mxu0
  %v185 = vadd.f32 0.0, %v184
  %v186 = vpop.f32.mrf.mxu0
  %187 = vmatprep.mubr.bf16.mxu0 0
  %188 = vmatmul.mubr.bf16.gmra.mxu0 %v78
  %v189 = vpop.f32.mrf.mxu0
  %v190 = vadd.f32 0.0, %v189
  %v191 = vpop.f32.mrf.mxu0
  %v192 = vpop.f32.mrf.mxu0
  %v193 = vadd.f32 0.0, %v192
  %v194 = vpop.f32.mrf.mxu0
  %195 = vdwg.mxu0
  %v196 = vadd.f32 %v27, %v166
  %v197 = vadd.f32 %v28, %v169
  %v198 = vadd.f32 %v29, %v174
  %v199 = vadd.f32 %v30, %v177
  %v200 = vadd.f32 %v31, %v182
  %v201 = vadd.f32 %v32, %v185
  %v202 = vadd.f32 %v33, %v190
  %v203 = vadd.f32 %v34, %v193
  %204 = vst [vmem:[#allocation2] sm:$0xff] %v196
  %205 = vst [vmem:[#allocation2 + $0x8] sm:$0xff] %v197
  %206 = vst [vmem:[#allocation2 + $0x10] sm:$0xff] %v198
  %207 = vst [vmem:[#allocation2 + $0x18] sm:$0xff] %v199
  %208 = vst [vmem:[#allocation2 + $0x20] sm:$0xff] %v200
  %209 = vst [vmem:[#allocation2 + $0x28] sm:$0xff] %v201
  %210 = vst [vmem:[#allocation2 + $0x30] sm:$0xff] %v202
  %211 = vst [vmem:[#allocation2 + $0x38] sm:$0xff] %v203
  // Predicated region
  $region18: #{decoder_rnn_forward.3} parent=0 // pred_check
    %p212 = pneg %p15
  $region19: #{decoder_rnn_forward.3} parent=0 // pred_check_branch
    %214 = sbr.rel (%p212) target = $region21
  $region20: #{decoder_rnn_forward.3} parent=0 // pred_region
    %v215 = vld [vmem:[#allocation2] sm:$0xff]
    %v216 = vld [vmem:[#allocation2 + $0x8] sm:$0xff]
    %v217 = vld [vmem:[#allocation2 + $0x10] sm:$0xff]
    %v218 = vld [vmem:[#allocation2 + $0x18] sm:$0xff]
    %v219 = vld [vmem:[#allocation2 + $0x20] sm:$0xff]
    %v220 = vld [vmem:[#allocation2 + $0x28] sm:$0xff]
    %v221 = vld [vmem:[#allocation2 + $0x30] sm:$0xff]
    %v222 = vld [vmem:[#allocation2 + $0x38] sm:$0xff]
    %v223 = vld [vmem:[%s2] sm:$0x1]
    %v225 = vlaneseq
    %v226 = vshrl.u32 %v225, 7
    %v227 = vsub.s32 0, %v226
    %v228 = vrot.slane %v223, %v227
    %v230 = vadd.f32 %v215, %v228
    %v231 = vadd.f32 %v216, %v228
    %v232 = vadd.f32 %v217, %v228
    %v233 = vadd.f32 %v218, %v228
    %v234 = vadd.f32 %v219, %v228
    %v235 = vadd.f32 %v220, %v228
    %v236 = vadd.f32 %v221, %v228
    %v237 = vadd.f32 %v222, %v228
    %238 = vst [vmem:[%s3] sm:$0xff] %v230
    %239 = vst [vmem:[%s3 + $0x8] sm:$0xff] %v231
    %240 = vst [vmem:[%s3 + $0x10] sm:$0xff] %v232
    %241 = vst [vmem:[%s3 + $0x18] sm:$0xff] %v233
    %242 = vst [vmem:[%s3 + $0x20] sm:$0xff] %v234
    %243 = vst [vmem:[%s3 + $0x28] sm:$0xff] %v235
    %244 = vst [vmem:[%s3 + $0x30] sm:$0xff] %v236
    %245 = vst [vmem:[%s3 + $0x38] sm:$0xff] %v237
  $region21: #{decoder_rnn_forward.3} parent=0 // pred_fallthru
    _
  // Predicated region
  $region22: #{decoder_rnn_forward.3} parent=0 // pred_check
    _
  $region23: #{decoder_rnn_forward.3} parent=0 // pred_check_branch
    %247 = sbr.rel (0) target = $region25
  $region24: #{decoder_rnn_forward.3} parent=0 // pred_region
    _
  $region25: #{decoder_rnn_forward.3} parent=0 // pred_fallthru
    _
  // Predicated region
  $region26: #{decoder_rnn_forward.3} parent=0 // pred_check
    _
  $region27: #{decoder_rnn_forward.3} parent=0 // pred_check_branch
    %249 = sbr.rel (0) target = $region29
  $region28: #{decoder_rnn_forward.3} parent=0 // pred_region
    _
  $region29: #{decoder_rnn_forward.3} parent=0 // pred_fallthru
    _

// kernel: decoder_rnn_forward.2
$region0: #{decoder_rnn_forward.2}
  #allocation0 [shape = 'u32[]', space=smem, size = 0x4, offset = 0x4, fixed_abs, tag = 'smem constant byte address 0x4 - core index']
  #allocation1 [shape = 'u32[144,128]{1,0:T(1,128)}', space=vmem, size = 0x12000, scoped, tag = 'internal scratch']
  #allocation2 [shape = 'f32[8,8,512]{2,1,0:T(8,128)}', space=vmem, size = 0x20000, scoped, tag = 'scratch operand']
  #allocation3 [shape = 'f32[8,128]{1,0:T(8,128)}', space=vmem, size = 0x1000, scoped, tag = 'scratch operand']
  #allocation4 [shape = 'f32[8,128]{1,0:T(8,128)}', space=vmem, size = 0x1000, scoped, tag = 'scratch operand']
  %s0 = inlined_call_operand.vmem [shape: bf16[8,8,128], index: 0, kind: input, shape index: {}]
  %s1 = inlined_call_operand.vmem [shape: bf16[128,512], index: 1, kind: input, shape index: {}]
  %s2 = inlined_call_operand.vmem [shape: bf16[128,512], index: 2, kind: input, shape index: {}]
  %s3 = inlined_call_operand.vmem [shape: f32[1,512], index: 3, kind: input, shape index: {}]
  %s4 = inlined_call_operand.vmem [shape: bf16[8,8,128], index: 4, kind: output, shape index: {}]
  %s5 = sld [smem:[#allocation0]]
  $region30: #{decoder_rnn_forward.2} parent=0
    _
  %s7 = ssub.s32 1, %s5
  %s8 = scalar_select 0, %s7, %s5
  // Predicated region
  $region2: #{decoder_rnn_forward.2} parent=0 // pred_check
    _
  $region3: #{decoder_rnn_forward.2} parent=0 // pred_check_branch
    %10 = sbr.rel (0) target = $region5
  $region4: #{decoder_rnn_forward.2} parent=0 // pred_region
    _
  $region5: #{decoder_rnn_forward.2} parent=0 // pred_fallthru
    _
  // Predicated region
  $region6: #{decoder_rnn_forward.2} parent=0 // pred_check
    _
  $region7: #{decoder_rnn_forward.2} parent=0 // pred_check_branch
    %12 = sbr.rel (0) target = $region9
  $region8: #{decoder_rnn_forward.2} parent=0 // pred_region
    _
  $region9: #{decoder_rnn_forward.2} parent=0 // pred_fallthru
    _
  // Predicated region
  $region10: #{decoder_rnn_forward.2} parent=0 // pred_check
    _
  $region11: #{decoder_rnn_forward.2} parent=0 // pred_check_branch
    %14 = sbr.rel (0) target = $region13
  $region12: #{decoder_rnn_forward.2} parent=0 // pred_region
    _
  $region13: #{decoder_rnn_forward.2} parent=0 // pred_fallthru
    _
  // Predicated region
  $region14: #{decoder_rnn_forward.2} parent=0 // pred_check
    _
  $region15: #{decoder_rnn_forward.2} parent=0 // pred_check_branch
    %16 = sbr.rel (0) target = $region17
  $region16: #{decoder_rnn_forward.2} parent=0 // pred_region
    _
  $region17: #{decoder_rnn_forward.2} parent=0 // pred_fallthru
    _
  %p18 = scmp.eq.s32.totalorder 0, 0
  // Predicated region
  $region18: #{decoder_rnn_forward.2} parent=0 // pred_check
    %p19 = pneg %p18
  $region19: #{decoder_rnn_forward.2} parent=0 // pred_check_branch
    %21 = sbr.rel (%p19) target = $region21
  $region20: #{decoder_rnn_forward.2} parent=0 // pred_region
    %22 = vst [vmem:[#allocation3] sm:$0xff] 0.0
    %23 = vst [vmem:[#allocation4] sm:$0xff] 0.0
  $region21: #{decoder_rnn_forward.2} parent=0 // pred_fallthru
    _
  %v24 = vld [vmem:[%s1] sm:$0xff]
  %v25 = vld [vmem:[%s1 + $0x8] sm:$0xff]
  %v26 = vld [vmem:[%s1 + $0x10] sm:$0xff]
  %v27 = vld [vmem:[%s1 + $0x18] sm:$0xff]
  %v28 = vld [vmem:[%s1 + $0x20] sm:$0xff]
  %v29 = vld [vmem:[%s1 + $0x28] sm:$0xff]
  %v30 = vld [vmem:[%s1 + $0x30] sm:$0xff]
  %v31 = vld [vmem:[%s1 + $0x38] sm:$0xff]
  %v32 = vld [vmem:[%s1 + $0x40] sm:$0xff]
  %v33 = vld [vmem:[%s1 + $0x48] sm:$0xff]
  %v34 = vld [vmem:[%s1 + $0x50] sm:$0xff]
  %v35 = vld [vmem:[%s1 + $0x58] sm:$0xff]
  %v36 = vld [vmem:[%s1 + $0x60] sm:$0xff]
  %v37 = vld [vmem:[%s1 + $0x68] sm:$0xff]
  %v38 = vld [vmem:[%s1 + $0x70] sm:$0xff]
  %v39 = vld [vmem:[%s1 + $0x78] sm:$0xff]
  %v40 = vld [vmem:[%s1 + $0x80] sm:$0xff]
  %v41 = vld [vmem:[%s1 + $0x88] sm:$0xff]
  %v42 = vld [vmem:[%s1 + $0x90] sm:$0xff]
  %v43 = vld [vmem:[%s1 + $0x98] sm:$0xff]
  %v44 = vld [vmem:[%s1 + $0xa0] sm:$0xff]
  %v45 = vld [vmem:[%s1 + $0xa8] sm:$0xff]
  %v46 = vld [vmem:[%s1 + $0xb0] sm:$0xff]
  %v47 = vld [vmem:[%s1 + $0xb8] sm:$0xff]
  %v48 = vld [vmem:[%s1 + $0xc0] sm:$0xff]
  %v49 = vld [vmem:[%s1 + $0xc8] sm:$0xff]
  %v50 = vld [vmem:[%s1 + $0xd0] sm:$0xff]
  %v51 = vld [vmem:[%s1 + $0xd8] sm:$0xff]
  %v52 = vld [vmem:[%s1 + $0xe0] sm:$0xff]
  %v53 = vld [vmem:[%s1 + $0xe8] sm:$0xff]
  %v54 = vld [vmem:[%s1 + $0xf0] sm:$0xff]
  %v55 = vld [vmem:[%s1 + $0xf8] sm:$0xff]
  %v56 = vld [vmem:[%s2] sm:$0xff]
  %v57 = vld [vmem:[%s2 + $0x8] sm:$0xff]
  %v58 = vld [vmem:[%s2 + $0x10] sm:$0xff]
  %v59 = vld [vmem:[%s2 + $0x18] sm:$0xff]
  %v60 = vld [vmem:[%s2 + $0x20] sm:$0xff]
  %v61 = vld [vmem:[%s2 + $0x28] sm:$0xff]
  %v62 = vld [vmem:[%s2 + $0x30] sm:$0xff]
  %v63 = vld [vmem:[%s2 + $0x38] sm:$0xff]
  %v64 = vld [vmem:[%s2 + $0x40] sm:$0xff]
  %v65 = vld [vmem:[%s2 + $0x48] sm:$0xff]
  %v66 = vld [vmem:[%s2 + $0x50] sm:$0xff]
  %v67 = vld [vmem:[%s2 + $0x58] sm:$0xff]
  %v68 = vld [vmem:[%s2 + $0x60] sm:$0xff]
  %v69 = vld [vmem:[%s2 + $0x68] sm:$0xff]
  %v70 = vld [vmem:[%s2 + $0x70] sm:$0xff]
  %v71 = vld [vmem:[%s2 + $0x78] sm:$0xff]
  %v72 = vld [vmem:[%s2 + $0x80] sm:$0xff]
  %v73 = vld [vmem:[%s2 + $0x88] sm:$0xff]
  %v74 = vld [vmem:[%s2 + $0x90] sm:$0xff]
  %v75 = vld [vmem:[%s2 + $0x98] sm:$0xff]
  %v76 = vld [vmem:[%s2 + $0xa0] sm:$0xff]
  %v77 = vld [vmem:[%s2 + $0xa8] sm:$0xff]
  %v78 = vld [vmem:[%s2 + $0xb0] sm:$0xff]
  %v79 = vld [vmem:[%s2 + $0xb8] sm:$0xff]
  %v80 = vld [vmem:[%s2 + $0xc0] sm:$0xff]
  %v81 = vld [vmem:[%s2 + $0xc8] sm:$0xff]
  %v82 = vld [vmem:[%s2 + $0xd0] sm:$0xff]
  %v83 = vld [vmem:[%s2 + $0xd8] sm:$0xff]
  %v84 = vld [vmem:[%s2 + $0xe0] sm:$0xff]
  %v85 = vld [vmem:[%s2 + $0xe8] sm:$0xff]
  %v86 = vld [vmem:[%s2 + $0xf0] sm:$0xff]
  %v87 = vld [vmem:[%s2 + $0xf8] sm:$0xff]
  %v88 = vld [vmem:[%s3] sm:$0xf]
  %v89 = vld [vmem:[%s0] sm:$0xf]
  %v90 = vld [vmem:[%s0 + $0x4] sm:$0xf]
  %v91 = vld [vmem:[%s0 + $0x8] sm:$0xf]
  %v92 = vld [vmem:[%s0 + $0xc] sm:$0xf]
  %v93 = vld [vmem:[%s0 + $0x10] sm:$0xf]
  %v94 = vld [vmem:[%s0 + $0x14] sm:$0xf]
  %v95 = vld [vmem:[%s0 + $0x18] sm:$0xf]
  %v96 = vld [vmem:[%s0 + $0x1c] sm:$0xf]
  %v98 = vlaneseq
  %v99 = vshrl.u32 %v98, 7
  %v100 = vsub.s32 0, %v99
  %v101 = vrot.slane %v88, %v100
  %v102 = vlaneseq
  %v103 = vshrl.u32 %v102, 7
  %v104 = vsub.s32 1, %v103
  %v105 = vrot.slane %v88, %v104
  %v106 = vlaneseq
  %v107 = vshrl.u32 %v106, 7
  %v108 = vsub.s32 2, %v107
  %v109 = vrot.slane %v88, %v108
  %v110 = vlaneseq
  %v111 = vshrl.u32 %v110, 7
  %v112 = vsub.s32 3, %v111
  %v113 = vrot.slane %v88, %v112
  %v126 = vunpack.c.l.b16 %v89
  %v127 = vunpack.c.l.b16 %v90
  %v128 = vunpack.c.l.b16 %v91
  %v129 = vunpack.c.l.b16 %v92
  %v130 = vunpack.c.l.b16 %v93
  %v131 = vunpack.c.l.b16 %v94
  %v132 = vunpack.c.l.b16 %v95
  %v133 = vunpack.c.l.b16 %v96
  %v134 = vpack.c.b16 %v127, %v126
  %v135 = vpack.c.b16 %v129, %v128
  %v136 = vpack.c.b16 %v131, %v130
  %v137 = vpack.c.b16 %v133, %v132
  %v174 = vunpack.c.l.b16 %v24
  %v175 = vunpack.c.h.b16 %v24
  %v176 = vunpack.c.l.b16 %v25
  %v177 = vunpack.c.h.b16 %v25
  %v178 = vunpack.c.l.b16 %v26
  %v179 = vunpack.c.h.b16 %v26
  %v180 = vunpack.c.l.b16 %v27
  %v181 = vunpack.c.h.b16 %v27
  %v182 = vunpack.c.l.b16 %v28
  %v183 = vunpack.c.h.b16 %v28
  %v184 = vunpack.c.l.b16 %v29
  %v185 = vunpack.c.h.b16 %v29
  %v186 = vunpack.c.l.b16 %v30
  %v187 = vunpack.c.h.b16 %v30
  %v188 = vunpack.c.l.b16 %v31
  %v189 = vunpack.c.h.b16 %v31
  %v190 = vunpack.c.l.b16 %v32
  %v191 = vunpack.c.h.b16 %v32
  %v192 = vunpack.c.l.b16 %v33
  %v193 = vunpack.c.h.b16 %v33
  %v194 = vunpack.c.l.b16 %v34
  %v195 = vunpack.c.h.b16 %v34
  %v196 = vunpack.c.l.b16 %v35
  %v197 = vunpack.c.h.b16 %v35
  %v198 = vunpack.c.l.b16 %v36
  %v199 = vunpack.c.h.b16 %v36
  %v200 = vunpack.c.l.b16 %v37
  %v201 = vunpack.c.h.b16 %v37
  %v202 = vunpack.c.l.b16 %v38
  %v203 = vunpack.c.h.b16 %v38
  %v204 = vunpack.c.l.b16 %v39
  %v205 = vunpack.c.h.b16 %v39
  %v206 = vunpack.c.l.b16 %v40
  %v207 = vunpack.c.h.b16 %v40
  %v208 = vunpack.c.l.b16 %v41
  %v209 = vunpack.c.h.b16 %v41
  %v210 = vunpack.c.l.b16 %v42
  %v211 = vunpack.c.h.b16 %v42
  %v212 = vunpack.c.l.b16 %v43
  %v213 = vunpack.c.h.b16 %v43
  %v214 = vunpack.c.l.b16 %v44
  %v215 = vunpack.c.h.b16 %v44
  %v216 = vunpack.c.l.b16 %v45
  %v217 = vunpack.c.h.b16 %v45
  %v218 = vunpack.c.l.b16 %v46
  %v219 = vunpack.c.h.b16 %v46
  %v220 = vunpack.c.l.b16 %v47
  %v221 = vunpack.c.h.b16 %v47
  %v222 = vunpack.c.l.b16 %v48
  %v223 = vunpack.c.h.b16 %v48
  %v224 = vunpack.c.l.b16 %v49
  %v225 = vunpack.c.h.b16 %v49
  %v226 = vunpack.c.l.b16 %v50
  %v227 = vunpack.c.h.b16 %v50
  %v228 = vunpack.c.l.b16 %v51
  %v229 = vunpack.c.h.b16 %v51
  %v230 = vunpack.c.l.b16 %v52
  %v231 = vunpack.c.h.b16 %v52
  %v232 = vunpack.c.l.b16 %v53
  %v233 = vunpack.c.h.b16 %v53
  %v234 = vunpack.c.l.b16 %v54
  %v235 = vunpack.c.h.b16 %v54
  %v236 = vunpack.c.l.b16 %v55
  %v237 = vunpack.c.h.b16 %v55
  %v238 = vpack.c.b16 %v178, %v174
  %v239 = vpack.c.b16 %v179, %v175
  %v240 = vpack.c.b16 %v180, %v176
  %v241 = vpack.c.b16 %v181, %v177
  %v242 = vpack.c.b16 %v186, %v182
  %v243 = vpack.c.b16 %v187, %v183
  %v244 = vpack.c.b16 %v188, %v184
  %v245 = vpack.c.b16 %v189, %v185
  %v246 = vpack.c.b16 %v194, %v190
  %v247 = vpack.c.b16 %v195, %v191
  %v248 = vpack.c.b16 %v196, %v192
  %v249 = vpack.c.b16 %v197, %v193
  %v250 = vpack.c.b16 %v202, %v198
  %v251 = vpack.c.b16 %v203, %v199
  %v252 = vpack.c.b16 %v204, %v200
  %v253 = vpack.c.b16 %v205, %v201
  %v254 = vpack.c.b16 %v210, %v206
  %v255 = vpack.c.b16 %v211, %v207
  %v256 = vpack.c.b16 %v212, %v208
  %v257 = vpack.c.b16 %v213, %v209
  %v258 = vpack.c.b16 %v218, %v214
  %v259 = vpack.c.b16 %v219, %v215
  %v260 = vpack.c.b16 %v220, %v216
  %v261 = vpack.c.b16 %v221, %v217
  %v262 = vpack.c.b16 %v226, %v222
  %v263 = vpack.c.b16 %v227, %v223
  %v264 = vpack.c.b16 %v228, %v224
  %v265 = vpack.c.b16 %v229, %v225
  %v266 = vpack.c.b16 %v234, %v230
  %v267 = vpack.c.b16 %v235, %v231
  %v268 = vpack.c.b16 %v236, %v232
  %v269 = vpack.c.b16 %v237, %v233
  %302 = vmatprep.subr.bf16.mxu0 %v267
  %303 = vmatpush1.bf16.msra.mxu0 %v266
  %304 = vmatprep.subr.bf16.mxu0 %v263
  %305 = vmatpush1.bf16.msra.mxu0 %v262
  %306 = vmatprep.subr.bf16.mxu0 %v259
  %307 = vmatpush1.bf16.msra.mxu0 %v258
  %308 = vmatprep.subr.bf16.mxu0 %v255
  %309 = vmatpush1.bf16.msra.mxu0 %v254
  %310 = vmatprep.subr.bf16.mxu0 %v251
  %311 = vmatpush1.bf16.msra.mxu0 %v250
  %312 = vmatprep.subr.bf16.mxu0 %v247
  %313 = vmatpush1.bf16.msra.mxu0 %v246
  %314 = vmatprep.subr.bf16.mxu0 %v243
  %315 = vmatpush1.bf16.msra.mxu0 %v242
  %316 = vmatprep.subr.bf16.mxu0 %v239
  %317 = vmatpush1.bf16.msra.mxu0 %v238
  %318 = vmatprep.subr.bf16.mxu0 0
  %319 = vmatpush2.bf16.msra.mxu0 0
  %320 = vmatprep.subr.bf16.mxu0 0
  %321 = vmatpush2.bf16.msra.mxu0 0
  %322 = vmatprep.subr.bf16.mxu0 0
  %323 = vmatpush2.bf16.msra.mxu0 0
  %324 = vmatprep.subr.bf16.mxu0 0
  %325 = vmatpush2.bf16.msra.mxu0 0
  %326 = vmatprep.subr.bf16.mxu0 0
  %327 = vmatpush2.bf16.msra.mxu0 0
  %328 = vmatprep.subr.bf16.mxu0 0
  %329 = vmatpush2.bf16.msra.mxu0 0
  %330 = vmatprep.subr.bf16.mxu0 0
  %331 = vmatpush2.bf16.msra.mxu0 0
  %332 = vmatprep.subr.bf16.mxu0 0
  %333 = vmatpush2.bf16.msra.mxu0 0
  %334 = vmatprep.mubr.bf16.mxu0 0
  %335 = vmatmul.mubr.bf16.gmra.mxu0 %v134
  %v336 = vpop.f32.mrf.mxu0
  %v337 = vadd.f32 %v101, %v336
  %v338 = vpop.f32.mrf.mxu0
  %v339 = vadd.f32 %v105, %v338
  %v340 = vpop.f32.mrf.mxu0
  %v341 = vadd.f32 %v101, %v340
  %v342 = vpop.f32.mrf.mxu0
  %v343 = vadd.f32 %v105, %v342
  %344 = vmatprep.mubr.bf16.mxu0 0
  %345 = vmatmul.mubr.bf16.gmra.mxu0 %v135
  %v346 = vpop.f32.mrf.mxu0
  %v347 = vadd.f32 %v101, %v346
  %v348 = vpop.f32.mrf.mxu0
  %v349 = vadd.f32 %v105, %v348
  %v350 = vpop.f32.mrf.mxu0
  %v351 = vadd.f32 %v101, %v350
  %v352 = vpop.f32.mrf.mxu0
  %v353 = vadd.f32 %v105, %v352
  %354 = vmatprep.mubr.bf16.mxu0 0
  %355 = vmatmul.mubr.bf16.gmra.mxu0 %v136
  %v356 = vpop.f32.mrf.mxu0
  %v357 = vadd.f32 %v101, %v356
  %v358 = vpop.f32.mrf.mxu0
  %v359 = vadd.f32 %v105, %v358
  %v360 = vpop.f32.mrf.mxu0
  %v361 = vadd.f32 %v101, %v360
  %v362 = vpop.f32.mrf.mxu0
  %v363 = vadd.f32 %v105, %v362
  %364 = vmatprep.mubr.bf16.mxu0 0
  %365 = vmatmul.mubr.bf16.gmra.mxu0 %v137
  %v366 = vpop.f32.mrf.mxu0
  %v367 = vadd.f32 %v101, %v366
  %v368 = vpop.f32.mrf.mxu0
  %v369 = vadd.f32 %v105, %v368
  %v370 = vpop.f32.mrf.mxu0
  %v371 = vadd.f32 %v101, %v370
  %v372 = vpop.f32.mrf.mxu0
  %v373 = vadd.f32 %v105, %v372
  %374 = vdwg.mxu0
  %375 = vmatprep.subr.bf16.mxu0 %v269
  %376 = vmatpush1.bf16.msra.mxu0 %v268
  %377 = vmatprep.subr.bf16.mxu0 %v265
  %378 = vmatpush1.bf16.msra.mxu0 %v264
  %379 = vmatprep.subr.bf16.mxu0 %v261
  %380 = vmatpush1.bf16.msra.mxu0 %v260
  %381 = vmatprep.subr.bf16.mxu0 %v257
  %382 = vmatpush1.bf16.msra.mxu0 %v256
  %383 = vmatprep.subr.bf16.mxu0 %v253
  %384 = vmatpush1.bf16.msra.mxu0 %v252
  %385 = vmatprep.subr.bf16.mxu0 %v249
  %386 = vmatpush1.bf16.msra.mxu0 %v248
  %387 = vmatprep.subr.bf16.mxu0 %v245
  %388 = vmatpush1.bf16.msra.mxu0 %v244
  %389 = vmatprep.subr.bf16.mxu0 %v241
  %390 = vmatpush1.bf16.msra.mxu0 %v240
  %391 = vmatprep.subr.bf16.mxu0 0
  %392 = vmatpush2.bf16.msra.mxu0 0
  %393 = vmatprep.subr.bf16.mxu0 0
  %394 = vmatpush2.bf16.msra.mxu0 0
  %395 = vmatprep.subr.bf16.mxu0 0
  %396 = vmatpush2.bf16.msra.mxu0 0
  %397 = vmatprep.subr.bf16.mxu0 0
  %398 = vmatpush2.bf16.msra.mxu0 0
  %399 = vmatprep.subr.bf16.mxu0 0
  %400 = vmatpush2.bf16.msra.mxu0 0
  %401 = vmatprep.subr.bf16.mxu0 0
  %402 = vmatpush2.bf16.msra.mxu0 0
  %403 = vmatprep.subr.bf16.mxu0 0
  %404 = vmatpush2.bf16.msra.mxu0 0
  %405 = vmatprep.subr.bf16.mxu0 0
  %406 = vmatpush2.bf16.msra.mxu0 0
  %407 = vmatprep.mubr.bf16.mxu0 0
  %408 = vmatmul.mubr.bf16.gmra.mxu0 %v134
  %v409 = vpop.f32.mrf.mxu0
  %v410 = vadd.f32 %v109, %v409
  %v411 = vpop.f32.mrf.mxu0
  %v412 = vadd.f32 %v113, %v411
  %v413 = vpop.f32.mrf.mxu0
  %v414 = vadd.f32 %v109, %v413
  %v415 = vpop.f32.mrf.mxu0
  %v416 = vadd.f32 %v113, %v415
  %417 = vmatprep.mubr.bf16.mxu0 0
  %418 = vmatmul.mubr.bf16.gmra.mxu0 %v135
  %v419 = vpop.f32.mrf.mxu0
  %v420 = vadd.f32 %v109, %v419
  %v421 = vpop.f32.mrf.mxu0
  %v422 = vadd.f32 %v113, %v421
  %v423 = vpop.f32.mrf.mxu0
  %v424 = vadd.f32 %v109, %v423
  %v425 = vpop.f32.mrf.mxu0
  %v426 = vadd.f32 %v113, %v425
  %427 = vmatprep.mubr.bf16.mxu0 0
  %428 = vmatmul.mubr.bf16.gmra.mxu0 %v136
  %v429 = vpop.f32.mrf.mxu0
  %v430 = vadd.f32 %v109, %v429
  %v431 = vpop.f32.mrf.mxu0
  %v432 = vadd.f32 %v113, %v431
  %v433 = vpop.f32.mrf.mxu0
  %v434 = vadd.f32 %v109, %v433
  %v435 = vpop.f32.mrf.mxu0
  %v436 = vadd.f32 %v113, %v435
  %437 = vmatprep.mubr.bf16.mxu0 0
  %438 = vmatmul.mubr.bf16.gmra.mxu0 %v137
  %v439 = vpop.f32.mrf.mxu0
  %v440 = vadd.f32 %v109, %v439
  %v441 = vpop.f32.mrf.mxu0
  %v442 = vadd.f32 %v113, %v441
  %v443 = vpop.f32.mrf.mxu0
  %v444 = vadd.f32 %v109, %v443
  %v445 = vpop.f32.mrf.mxu0
  %v446 = vadd.f32 %v113, %v445
  %447 = vdwg.mxu0
  %448 = vst [vmem:[#allocation2] sm:$0xff] %v337
  %449 = vst [vmem:[#allocation2 + $0x8] sm:$0xff] %v339
  %450 = vst [vmem:[#allocation2 + $0x10] sm:$0xff] %v410
  %451 = vst [vmem:[#allocation2 + $0x18] sm:$0xff] %v412
  %452 = vst [vmem:[#allocation2 + $0x20] sm:$0xff] %v341
  %453 = vst [vmem:[#allocation2 + $0x28] sm:$0xff] %v343
  %454 = vst [vmem:[#allocation2 + $0x30] sm:$0xff] %v414
  %455 = vst [vmem:[#allocation2 + $0x38] sm:$0xff] %v416
  %456 = vst [vmem:[#allocation2 + $0x40] sm:$0xff] %v347
  %457 = vst [vmem:[#allocation2 + $0x48] sm:$0xff] %v349
  %458 = vst [vmem:[#allocation2 + $0x50] sm:$0xff] %v420
  %459 = vst [vmem:[#allocation2 + $0x58] sm:$0xff] %v422
  %460 = vst [vmem:[#allocation2 + $0x60] sm:$0xff] %v351
  %461 = vst [vmem:[#allocation2 + $0x68] sm:$0xff] %v353
  %462 = vst [vmem:[#allocation2 + $0x70] sm:$0xff] %v424
  %463 = vst [vmem:[#allocation2 + $0x78] sm:$0xff] %v426
  %464 = vst [vmem:[#allocation2 + $0x80] sm:$0xff] %v357
  %465 = vst [vmem:[#allocation2 + $0x88] sm:$0xff] %v359
  %466 = vst [vmem:[#allocation2 + $0x90] sm:$0xff] %v430
  %467 = vst [vmem:[#allocation2 + $0x98] sm:$0xff] %v432
  %468 = vst [vmem:[#allocation2 + $0xa0] sm:$0xff] %v361
  %469 = vst [vmem:[#allocation2 + $0xa8] sm:$0xff] %v363
  %470 = vst [vmem:[#allocation2 + $0xb0] sm:$0xff] %v434
  %471 = vst [vmem:[#allocation2 + $0xb8] sm:$0xff] %v436
  %472 = vst [vmem:[#allocation2 + $0xc0] sm:$0xff] %v367
  %473 = vst [vmem:[#allocation2 + $0xc8] sm:$0xff] %v369
  %474 = vst [vmem:[#allocation2 + $0xd0] sm:$0xff] %v440
  %475 = vst [vmem:[#allocation2 + $0xd8] sm:$0xff] %v442
  %476 = vst [vmem:[#allocation2 + $0xe0] sm:$0xff] %v371
  %477 = vst [vmem:[#allocation2 + $0xe8] sm:$0xff] %v373
  %478 = vst [vmem:[#allocation2 + $0xf0] sm:$0xff] %v444
  %479 = vst [vmem:[#allocation2 + $0xf8] sm:$0xff] %v446
  %v480 = vld [vmem:[#allocation2] sm:$0xff]
  %v481 = vld [vmem:[#allocation2 + $0x8] sm:$0xff]
  %v482 = vld [vmem:[#allocation2 + $0x10] sm:$0xff]
  %v483 = vld [vmem:[#allocation2 + $0x18] sm:$0xff]
  %v484 = vld [vmem:[#allocation3] sm:$0xff]
  %v485 = vpack.c.bf16 %v484, %v484
  %v518 = vunpack.c.l.b16 %v56
  %v519 = vunpack.c.h.b16 %v56
  %v520 = vunpack.c.l.b16 %v57
  %v521 = vunpack.c.h.b16 %v57
  %v522 = vunpack.c.l.b16 %v58
  %v523 = vunpack.c.h.b16 %v58
  %v524 = vunpack.c.l.b16 %v59
  %v525 = vunpack.c.h.b16 %v59
  %v526 = vunpack.c.l.b16 %v60
  %v527 = vunpack.c.h.b16 %v60
  %v528 = vunpack.c.l.b16 %v61
  %v529 = vunpack.c.h.b16 %v61
  %v530 = vunpack.c.l.b16 %v62
  %v531 = vunpack.c.h.b16 %v62
  %v532 = vunpack.c.l.b16 %v63
  %v533 = vunpack.c.h.b16 %v63
  %v534 = vunpack.c.l.b16 %v64
  %v535 = vunpack.c.h.b16 %v64
  %v536 = vunpack.c.l.b16 %v65
  %v537 = vunpack.c.h.b16 %v65
  %v538 = vunpack.c.l.b16 %v66
  %v539 = vunpack.c.h.b16 %v66
  %v540 = vunpack.c.l.b16 %v67
  %v541 = vunpack.c.h.b16 %v67
  %v542 = vunpack.c.l.b16 %v68
  %v543 = vunpack.c.h.b16 %v68
  %v544 = vunpack.c.l.b16 %v69
  %v545 = vunpack.c.h.b16 %v69
  %v546 = vunpack.c.l.b16 %v70
  %v547 = vunpack.c.h.b16 %v70
  %v548 = vunpack.c.l.b16 %v71
  %v549 = vunpack.c.h.b16 %v71
  %v550 = vunpack.c.l.b16 %v72
  %v551 = vunpack.c.h.b16 %v72
  %v552 = vunpack.c.l.b16 %v73
  %v553 = vunpack.c.h.b16 %v73
  %v554 = vunpack.c.l.b16 %v74
  %v555 = vunpack.c.h.b16 %v74
  %v556 = vunpack.c.l.b16 %v75
  %v557 = vunpack.c.h.b16 %v75
  %v558 = vunpack.c.l.b16 %v76
  %v559 = vunpack.c.h.b16 %v76
  %v560 = vunpack.c.l.b16 %v77
  %v561 = vunpack.c.h.b16 %v77
  %v562 = vunpack.c.l.b16 %v78
  %v563 = vunpack.c.h.b16 %v78
  %v564 = vunpack.c.l.b16 %v79
  %v565 = vunpack.c.h.b16 %v79
  %v566 = vunpack.c.l.b16 %v80
  %v567 = vunpack.c.h.b16 %v80
  %v568 = vunpack.c.l.b16 %v81
  %v569 = vunpack.c.h.b16 %v81
  %v570 = vunpack.c.l.b16 %v82
  %v571 = vunpack.c.h.b16 %v82
  %v572 = vunpack.c.l.b16 %v83
  %v573 = vunpack.c.h.b16 %v83
  %v574 = vunpack.c.l.b16 %v84
  %v575 = vunpack.c.h.b16 %v84
  %v576 = vunpack.c.l.b16 %v85
  %v577 = vunpack.c.h.b16 %v85
  %v578 = vunpack.c.l.b16 %v86
  %v579 = vunpack.c.h.b16 %v86
  %v580 = vunpack.c.l.b16 %v87
  %v581 = vunpack.c.h.b16 %v87
  %v582 = vpack.c.b16 %v522, %v518
  %v583 = vpack.c.b16 %v523, %v519
  %v584 = vpack.c.b16 %v524, %v520
  %v585 = vpack.c.b16 %v525, %v521
  %v586 = vpack.c.b16 %v530, %v526
  %v587 = vpack.c.b16 %v531, %v527
  %v588 = vpack.c.b16 %v532, %v528
  %v589 = vpack.c.b16 %v533, %v529
  %v590 = vpack.c.b16 %v538, %v534
  %v591 = vpack.c.b16 %v539, %v535
  %v592 = vpack.c.b16 %v540, %v536
  %v593 = vpack.c.b16 %v541, %v537
  %v594 = vpack.c.b16 %v546, %v542
  %v595 = vpack.c.b16 %v547, %v543
  %v596 = vpack.c.b16 %v548, %v544
  %v597 = vpack.c.b16 %v549, %v545
  %v598 = vpack.c.b16 %v554, %v550
  %v599 = vpack.c.b16 %v555, %v551
  %v600 = vpack.c.b16 %v556, %v552
  %v601 = vpack.c.b16 %v557, %v553
  %v602 = vpack.c.b16 %v562, %v558
  %v603 = vpack.c.b16 %v563, %v559
  %v604 = vpack.c.b16 %v564, %v560
  %v605 = vpack.c.b16 %v565, %v561
  %v606 = vpack.c.b16 %v570, %v566
  %v607 = vpack.c.b16 %v571, %v567
  %v608 = vpack.c.b16 %v572, %v568
  %v609 = vpack.c.b16 %v573, %v569
  %v610 = vpack.c.b16 %v578, %v574
  %v611 = vpack.c.b16 %v579, %v575
  %v612 = vpack.c.b16 %v580, %v576
  %v613 = vpack.c.b16 %v581, %v577
  %646 = vmatprep.subr.bf16.mxu0 %v611
  %647 = vmatpush1.bf16.msra.mxu0 %v610
  %648 = vmatprep.subr.bf16.mxu0 %v607
  %649 = vmatpush1.bf16.msra.mxu0 %v606
  %650 = vmatprep.subr.bf16.mxu0 %v603
  %651 = vmatpush1.bf16.msra.mxu0 %v602
  %652 = vmatprep.subr.bf16.mxu0 %v599
  %653 = vmatpush1.bf16.msra.mxu0 %v598
  %654 = vmatprep.subr.bf16.mxu0 %v595
  %655 = vmatpush1.bf16.msra.mxu0 %v594
  %656 = vmatprep.subr.bf16.mxu0 %v591
  %657 = vmatpush1.bf16.msra.mxu0 %v590
  %658 = vmatprep.subr.bf16.mxu0 %v587
  %659 = vmatpush1.bf16.msra.mxu0 %v586
  %660 = vmatprep.subr.bf16.mxu0 %v583
  %661 = vmatpush1.bf16.msra.mxu0 %v582
  %662 = vmatprep.subr.bf16.mxu0 0
  %663 = vmatpush2.bf16.msra.mxu0 0
  %664 = vmatprep.subr.bf16.mxu0 0
  %665 = vmatpush2.bf16.msra.mxu0 0
  %666 = vmatprep.subr.bf16.mxu0 0
  %667 = vmatpush2.bf16.msra.mxu0 0
  %668 = vmatprep.subr.bf16.mxu0 0
  %669 = vmatpush2.bf16.msra.mxu0 0
  %670 = vmatprep.subr.bf16.mxu0 0
  %671 = vmatpush2.bf16.msra.mxu0 0
  %672 = vmatprep.subr.bf16.mxu0 0
  %673 = vmatpush2.bf16.msra.mxu0 0
  %674 = vmatprep.subr.bf16.mxu0 0
  %675 = vmatpush2.bf16.msra.mxu0 0
  %676 = vmatprep.subr.bf16.mxu0 0
  %677 = vmatpush2.bf16.msra.mxu0 0
  %678 = vmatprep.mubr.bf16.mxu0 0
  %679 = vmatmul.mubr.bf16.gmra.mxu0 %v485
  %v680 = vpop.f32.mrf.mxu0
  %v681 = vadd.f32 0.0, %v680
  %v682 = vpop.f32.mrf.mxu0
  %v683 = vadd.f32 0.0, %v682
  %v684 = vpop.f32.mrf.mxu0
  %v685 = vpop.f32.mrf.mxu0
  %686 = vdwg.mxu0
  %687 = vmatprep.subr.bf16.mxu0 %v613
  %688 = vmatpush1.bf16.msra.mxu0 %v612
  %689 = vmatprep.subr.bf16.mxu0 %v609
  %690 = vmatpush1.bf16.msra.mxu0 %v608
  %691 = vmatprep.subr.bf16.mxu0 %v605
  %692 = vmatpush1.bf16.msra.mxu0 %v604
  %693 = vmatprep.subr.bf16.mxu0 %v601
  %694 = vmatpush1.bf16.msra.mxu0 %v600
  %695 = vmatprep.subr.bf16.mxu0 %v597
  %696 = vmatpush1.bf16.msra.mxu0 %v596
  %697 = vmatprep.subr.bf16.mxu0 %v593
  %698 = vmatpush1.bf16.msra.mxu0 %v592
  %699 = vmatprep.subr.bf16.mxu0 %v589
  %700 = vmatpush1.bf16.msra.mxu0 %v588
  %701 = vmatprep.subr.bf16.mxu0 %v585
  %702 = vmatpush1.bf16.msra.mxu0 %v584
  %703 = vmatprep.subr.bf16.mxu0 0
  %704 = vmatpush2.bf16.msra.mxu0 0
  %705 = vmatprep.subr.bf16.mxu0 0
  %706 = vmatpush2.bf16.msra.mxu0 0
  %707 = vmatprep.subr.bf16.mxu0 0
  %708 = vmatpush2.bf16.msra.mxu0 0
  %709 = vmatprep.subr.bf16.mxu0 0
  %710 = vmatpush2.bf16.msra.mxu0 0
  %711 = vmatprep.subr.bf16.mxu0 0
  %712 = vmatpush2.bf16.msra.mxu0 0
  %713 = vmatprep.subr.bf16.mxu0 0
  %714 = vmatpush2.bf16.msra.mxu0 0
  %715 = vmatprep.subr.bf16.mxu0 0
  %716 = vmatpush2.bf16.msra.mxu0 0
  %717 = vmatprep.subr.bf16.mxu0 0
  %718 = vmatpush2.bf16.msra.mxu0 0
  %719 = vmatprep.mubr.bf16.mxu0 0
  %720 = vmatmul.mubr.bf16.gmra.mxu0 %v485
  %v721 = vpop.f32.mrf.mxu0
  %v722 = vadd.f32 0.0, %v721
  %v723 = vpop.f32.mrf.mxu0
  %v724 = vadd.f32 0.0, %v723
  %v725 = vpop.f32.mrf.mxu0
  %v726 = vpop.f32.mrf.mxu0
  %727 = vdwg.mxu0
  %v728 = vadd.f32 %v480, %v681
  %v729 = vadd.f32 %v481, %v683
  %v730 = vadd.f32 %v482, %v722
  %v731 = vadd.f32 %v483, %v724
  %v732 = vxor.u32 %v728, 2147483648
  %v733 = vmul.f32 %v732, 1.442695
  %v734 = vpow.pop %v733
  %v735 = vadd.f32 %v734, 1.0
  %v736 = vrcp.pop %v735
  %v737 = vmul.f32 1.0, %v736
  %v738 = vxor.u32 %v729, 2147483648
  %v739 = vmul.f32 %v738, 1.442695
  %v740 = vpow.pop %v739
  %v741 = vadd.f32 %v740, 1.0
  %v742 = vrcp.pop %v741
  %v743 = vmul.f32 1.0, %v742
  %v744 = vtanh.pop %v730
  %v745 = vxor.u32 %v731, 2147483648
  %v746 = vmul.f32 %v745, 1.442695
  %v747 = vpow.pop %v746
  %v748 = vadd.f32 %v747, 1.0
  %v749 = vrcp.pop %v748
  %v750 = vmul.f32 1.0, %v749
  %v751 = vld [vmem:[#allocation4] sm:$0xff]
  %v752 = vmul.f32 %v743, %v751
  %v753 = vmul.f32 %v737, %v744
  %v754 = vadd.f32 %v752, %v753
  %v755 = vtanh.pop %v754
  %v756 = vmul.f32 %v750, %v755
  %757 = vst [vmem:[#allocation4] sm:$0xff] %v754
  %758 = vst [vmem:[#allocation3] sm:$0xff] %v756
  %v759 = vpack.c.bf16 %v756, %v756
  %760 = vst [vmem:[%s4] sm:$0xf] %v759
  %s761 = scalar_lea.vmem [#allocation2], 32
  %v762 = vld [vmem:[%s761] sm:$0xff]
  %v763 = vld [vmem:[%s761 + $0x8] sm:$0xff]
  %v764 = vld [vmem:[%s761 + $0x10] sm:$0xff]
  %v765 = vld [vmem:[%s761 + $0x18] sm:$0xff]
  %v766 = vld [vmem:[#allocation3] sm:$0xff]
  %v767 = vpack.c.bf16 %v766, %v766
  %768 = vmatprep.subr.bf16.mxu0 %v611
  %769 = vmatpush1.bf16.msra.mxu0 %v610
  %770 = vmatprep.subr.bf16.mxu0 %v607
  %771 = vmatpush1.bf16.msra.mxu0 %v606
  %772 = vmatprep.subr.bf16.mxu0 %v603
  %773 = vmatpush1.bf16.msra.mxu0 %v602
  %774 = vmatprep.subr.bf16.mxu0 %v599
  %775 = vmatpush1.bf16.msra.mxu0 %v598
  %776 = vmatprep.subr.bf16.mxu0 %v595
  %777 = vmatpush1.bf16.msra.mxu0 %v594
  %778 = vmatprep.subr.bf16.mxu0 %v591
  %779 = vmatpush1.bf16.msra.mxu0 %v590
  %780 = vmatprep.subr.bf16.mxu0 %v587
  %781 = vmatpush1.bf16.msra.mxu0 %v586
  %782 = vmatprep.subr.bf16.mxu0 %v583
  %783 = vmatpush1.bf16.msra.mxu0 %v582
  %784 = vmatprep.subr.bf16.mxu0 0
  %785 = vmatpush2.bf16.msra.mxu0 0
  %786 = vmatprep.subr.bf16.mxu0 0
  %787 = vmatpush2.bf16.msra.mxu0 0
  %788 = vmatprep.subr.bf16.mxu0 0
  %789 = vmatpush2.bf16.msra.mxu0 0
  %790 = vmatprep.subr.bf16.mxu0 0
  %791 = vmatpush2.bf16.msra.mxu0 0
  %792 = vmatprep.subr.bf16.mxu0 0
  %793 = vmatpush2.bf16.msra.mxu0 0
  %794 = vmatprep.subr.bf16.mxu0 0
  %795 = vmatpush2.bf16.msra.mxu0 0
  %796 = vmatprep.subr.bf16.mxu0 0
  %797 = vmatpush2.bf16.msra.mxu0 0
  %798 = vmatprep.subr.bf16.mxu0 0
  %799 = vmatpush2.bf16.msra.mxu0 0
  %800 = vmatprep.mubr.bf16.mxu0 0
  %801 = vmatmul.mubr.bf16.gmra.mxu0 %v767
  %v802 = vpop.f32.mrf.mxu0
  %v803 = vadd.f32 0.0, %v802
  %v804 = vpop.f32.mrf.mxu0
  %v805 = vadd.f32 0.0, %v804
  %v806 = vpop.f32.mrf.mxu0
  %v807 = vpop.f32.mrf.mxu0
  %808 = vdwg.mxu0
  %809 = vmatprep.subr.bf16.mxu0 %v613
  %810 = vmatpush1.bf16.msra.mxu0 %v612
  %811 = vmatprep.subr.bf16.mxu0 %v609
  %812 = vmatpush1.bf16.msra.mxu0 %v608
  %813 = vmatprep.subr.bf16.mxu0 %v605
  %814 = vmatpush1.bf16.msra.mxu0 %v604
  %815 = vmatprep.subr.bf16.mxu0 %v601
  %816 = vmatpush1.bf16.msra.mxu0 %v600
  %817 = vmatprep.subr.bf16.mxu0 %v597
  %818 = vmatpush1.bf16.msra.mxu0 %v596
  %819 = vmatprep.subr.bf16.mxu0 %v593
  %820 = vmatpush1.bf16.msra.mxu0 %v592
  %821 = vmatprep.subr.bf16.mxu0 %v589
  %822 = vmatpush1.bf16.msra.mxu0 %v588
  %823 = vmatprep.subr.bf16.mxu0 %v585
  %824 = vmatpush1.bf16.msra.mxu0 %v584
  %825 = vmatprep.subr.bf16.mxu0 0
  %826 = vmatpush2.bf16.msra.mxu0 0
  %827 = vmatprep.subr.bf16.mxu0 0
  %828 = vmatpush2.bf16.msra.mxu0 0
  %829 = vmatprep.subr.bf16.mxu0 0
  %830 = vmatpush2.bf16.msra.mxu0 0
  %831 = vmatprep.subr.bf16.mxu0 0
  %832 = vmatpush2.bf16.msra.mxu0 0
  %833 = vmatprep.subr.bf16.mxu0 0
  %834 = vmatpush2.bf16.msra.mxu0 0
  %835 = vmatprep.subr.bf16.mxu0 0
  %836 = vmatpush2.bf16.msra.mxu0 0
  %837 = vmatprep.subr.bf16.mxu0 0
  %838 = vmatpush2.bf16.msra.mxu0 0
  %839 = vmatprep.subr.bf16.mxu0 0
  %840 = vmatpush2.bf16.msra.mxu0 0
  %841 = vmatprep.mubr.bf16.mxu0 0
  %842 = vmatmul.mubr.bf16.gmra.mxu0 %v767
  %v843 = vpop.f32.mrf.mxu0
  %v844 = vadd.f32 0.0, %v843
  %v845 = vpop.f32.mrf.mxu0
  %v846 = vadd.f32 0.0, %v845
  %v847 = vpop.f32.mrf.mxu0
  %v848 = vpop.f32.mrf.mxu0
  %849 = vdwg.mxu0
  %v850 = vadd.f32 %v762, %v803
  %v851 = vadd.f32 %v763, %v805
  %v852 = vadd.f32 %v764, %v844
  %v853 = vadd.f32 %v765, %v846
  %v854 = vxor.u32 %v850, 2147483648
  %v855 = vmul.f32 %v854, 1.442695
  %v856 = vpow.pop %v855
  %v857 = vadd.f32 %v856, 1.0
  %v858 = vrcp.pop %v857
  %v859 = vmul.f32 1.0, %v858
  %v860 = vxor.u32 %v851, 2147483648
  %v861 = vmul.f32 %v860, 1.442695
  %v862 = vpow.pop %v861
  %v863 = vadd.f32 %v862, 1.0
  %v864 = vrcp.pop %v863
  %v865 = vmul.f32 1.0, %v864
  %v866 = vtanh.pop %v852
  %v867 = vxor.u32 %v853, 2147483648
  %v868 = vmul.f32 %v867, 1.442695
  %v869 = vpow.pop %v868
  %v870 = vadd.f32 %v869, 1.0
  %v871 = vrcp.pop %v870
  %v872 = vmul.f32 1.0, %v871
  %v873 = vld [vmem:[#allocation4] sm:$0xff]
  %v874 = vmul.f32 %v865, %v873
  %v875 = vmul.f32 %v859, %v866
  %v876 = vadd.f32 %v874, %v875
  %v877 = vtanh.pop %v876
  %v878 = vmul.f32 %v872, %v877
  %879 = vst [vmem:[#allocation4] sm:$0xff] %v876
  %880 = vst [vmem:[#allocation3] sm:$0xff] %v878
  %v881 = vpack.c.bf16 %v878, %v878
  %s882 = scalar_lea.vmem %s4, 4
  %883 = vst [vmem:[%s882] sm:$0xf] %v881
  %s884 = scalar_lea.vmem [#allocation2], 64
  %v885 = vld [vmem:[%s884] sm:$0xff]
  %v886 = vld [vmem:[%s884 + $0x8] sm:$0xff]
  %v887 = vld [vmem:[%s884 + $0x10] sm:$0xff]
  %v888 = vld [vmem:[%s884 + $0x18] sm:$0xff]
  %v889 = vld [vmem:[#allocation3] sm:$0xff]
  %v890 = vpack.c.bf16 %v889, %v889
  %891 = vmatprep.subr.bf16.mxu0 %v611
  %892 = vmatpush1.bf16.msra.mxu0 %v610
  %893 = vmatprep.subr.bf16.mxu0 %v607
  %894 = vmatpush1.bf16.msra.mxu0 %v606
  %895 = vmatprep.subr.bf16.mxu0 %v603
  %896 = vmatpush1.bf16.msra.mxu0 %v602
  %897 = vmatprep.subr.bf16.mxu0 %v599
  %898 = vmatpush1.bf16.msra.mxu0 %v598
  %899 = vmatprep.subr.bf16.mxu0 %v595
  %900 = vmatpush1.bf16.msra.mxu0 %v594
  %901 = vmatprep.subr.bf16.mxu0 %v591
  %902 = vmatpush1.bf16.msra.mxu0 %v590
  %903 = vmatprep.subr.bf16.mxu0 %v587
  %904 = vmatpush1.bf16.msra.mxu0 %v586
  %905 = vmatprep.subr.bf16.mxu0 %v583
  %906 = vmatpush1.bf16.msra.mxu0 %v582
  %907 = vmatprep.subr.bf16.mxu0 0
  %908 = vmatpush2.bf16.msra.mxu0 0
  %909 = vmatprep.subr.bf16.mxu0 0
  %910 = vmatpush2.bf16.msra.mxu0 0
  %911 = vmatprep.subr.bf16.mxu0 0
  %912 = vmatpush2.bf16.msra.mxu0 0
  %913 = vmatprep.subr.bf16.mxu0 0
  %914 = vmatpush2.bf16.msra.mxu0 0
  %915 = vmatprep.subr.bf16.mxu0 0
  %916 = vmatpush2.bf16.msra.mxu0 0
  %917 = vmatprep.subr.bf16.mxu0 0
  %918 = vmatpush2.bf16.msra.mxu0 0
  %919 = vmatprep.subr.bf16.mxu0 0
  %920 = vmatpush2.bf16.msra.mxu0 0
  %921 = vmatprep.subr.bf16.mxu0 0
  %922 = vmatpush2.bf16.msra.mxu0 0
  %923 = vmatprep.mubr.bf16.mxu0 0
  %924 = vmatmul.mubr.bf16.gmra.mxu0 %v890
  %v925 = vpop.f32.mrf.mxu0
  %v926 = vadd.f32 0.0, %v925
  %v927 = vpop.f32.mrf.mxu0
  %v928 = vadd.f32 0.0, %v927
  %v929 = vpop.f32.mrf.mxu0
  %v930 = vpop.f32.mrf.mxu0
  %931 = vdwg.mxu0
  %932 = vmatprep.subr.bf16.mxu0 %v613
  %933 = vmatpush1.bf16.msra.mxu0 %v612
  %934 = vmatprep.subr.bf16.mxu0 %v609
  %935 = vmatpush1.bf16.msra.mxu0 %v608
  %936 = vmatprep.subr.bf16.mxu0 %v605
  %937 = vmatpush1.bf16.msra.mxu0 %v604
  %938 = vmatprep.subr.bf16.mxu0 %v601
  %939 = vmatpush1.bf16.msra.mxu0 %v600
  %940 = vmatprep.subr.bf16.mxu0 %v597
  %941 = vmatpush1.bf16.msra.mxu0 %v596
  %942 = vmatprep.subr.bf16.mxu0 %v593
  %943 = vmatpush1.bf16.msra.mxu0 %v592
  %944 = vmatprep.subr.bf16.mxu0 %v589
  %945 = vmatpush1.bf16.msra.mxu0 %v588
  %946 = vmatprep.subr.bf16.mxu0 %v585
  %947 = vmatpush1.bf16.msra.mxu0 %v584
  %948 = vmatprep.subr.bf16.mxu0 0
  %949 = vmatpush2.bf16.msra.mxu0 0
  %950 = vmatprep.subr.bf16.mxu0 0
  %951 = vmatpush2.bf16.msra.mxu0 0
  %952 = vmatprep.subr.bf16.mxu0 0
  %953 = vmatpush2.bf16.msra.mxu0 0
  %954 = vmatprep.subr.bf16.mxu0 0
  %955 = vmatpush2.bf16.msra.mxu0 0
  %956 = vmatprep.subr.bf16.mxu0 0
  %957 = vmatpush2.bf16.msra.mxu0 0
  %958 = vmatprep.subr.bf16.mxu0 0
  %959 = vmatpush2.bf16.msra.mxu0 0
  %960 = vmatprep.subr.bf16.mxu0 0
  %961 = vmatpush2.bf16.msra.mxu0 0
  %962 = vmatprep.subr.bf16.mxu0 0
  %963 = vmatpush2.bf16.msra.mxu0 0
  %964 = vmatprep.mubr.bf16.mxu0 0
  %965 = vmatmul.mubr.bf16.gmra.mxu0 %v890
  %v966 = vpop.f32.mrf.mxu0
  %v967 = vadd.f32 0.0, %v966
  %v968 = vpop.f32.mrf.mxu0
  %v969 = vadd.f32 0.0, %v968
  %v970 = vpop.f32.mrf.mxu0
  %v971 = vpop.f32.mrf.mxu0
  %972 = vdwg.mxu0
  %v973 = vadd.f32 %v885, %v926
  %v974 = vadd.f32 %v886, %v928
  %v975 = vadd.f32 %v887, %v967
  %v976 = vadd.f32 %v888, %v969
  %v977 = vxor.u32 %v973, 2147483648
  %v978 = vmul.f32 %v977, 1.442695
  %v979 = vpow.pop %v978
  %v980 = vadd.f32 %v979, 1.0
  %v981 = vrcp.pop %v980
  %v982 = vmul.f32 1.0, %v981
  %v983 = vxor.u32 %v974, 2147483648
  %v984 = vmul.f32 %v983, 1.442695
  %v985 = vpow.pop %v984
  %v986 = vadd.f32 %v985, 1.0
  %v987 = vrcp.pop %v986
  %v988 = vmul.f32 1.0, %v987
  %v989 = vtanh.pop %v975
  %v990 = vxor.u32 %v976, 2147483648
  %v991 = vmul.f32 %v990, 1.442695
  %v992 = vpow.pop %v991
  %v993 = vadd.f32 %v992, 1.0
  %v994 = vrcp.pop %v993
  %v995 = vmul.f32 1.0, %v994
  %v996 = vld [vmem:[#allocation4] sm:$0xff]
  %v997 = vmul.f32 %v988, %v996
  %v998 = vmul.f32 %v982, %v989
  %v999 = vadd.f32 %v997, %v998
  %v1000 = vtanh.pop %v999
  %v1001 = vmul.f32 %v995, %v1000
  %1002 = vst [vmem:[#allocation4] sm:$0xff] %v999
  %1003 = vst [vmem:[#allocation3] sm:$0xff] %v1001
  %v1004 = vpack.c.bf16 %v1001, %v1001
  %s1005 = scalar_lea.vmem %s4, 8
  %1006 = vst [vmem:[%s1005] sm:$0xf] %v1004
  %s1007 = scalar_lea.vmem [#allocation2], 96
  %v1008 = vld [vmem:[%s1007] sm:$0xff]
  %v1009 = vld [vmem:[%s1007 + $0x8] sm:$0xff]
  %v1010 = vld [vmem:[%s1007 + $0x10] sm:$0xff]
  %v1011 = vld [vmem:[%s1007 + $0x18] sm:$0xff]
  %v1012 = vld [vmem:[#allocation3] sm:$0xff]
  %v1013 = vpack.c.bf16 %v1012, %v1012
  %1014 = vmatprep.subr.bf16.mxu0 %v611
  %1015 = vmatpush1.bf16.msra.mxu0 %v610
  %1016 = vmatprep.subr.bf16.mxu0 %v607
  %1017 = vmatpush1.bf16.msra.mxu0 %v606
  %1018 = vmatprep.subr.bf16.mxu0 %v603
  %1019 = vmatpush1.bf16.msra.mxu0 %v602
  %1020 = vmatprep.subr.bf16.mxu0 %v599
  %1021 = vmatpush1.bf16.msra.mxu0 %v598
  %1022 = vmatprep.subr.bf16.mxu0 %v595
  %1023 = vmatpush1.bf16.msra.mxu0 %v594
  %1024 = vmatprep.subr.bf16.mxu0 %v591
  %1025 = vmatpush1.bf16.msra.mxu0 %v590
  %1026 = vmatprep.subr.bf16.mxu0 %v587
  %1027 = vmatpush1.bf16.msra.mxu0 %v586
  %1028 = vmatprep.subr.bf16.mxu0 %v583
  %1029 = vmatpush1.bf16.msra.mxu0 %v582
  %1030 = vmatprep.subr.bf16.mxu0 0
  %1031 = vmatpush2.bf16.msra.mxu0 0
  %1032 = vmatprep.subr.bf16.mxu0 0
  %1033 = vmatpush2.bf16.msra.mxu0 0
  %1034 = vmatprep.subr.bf16.mxu0 0
  %1035 = vmatpush2.bf16.msra.mxu0 0
  %1036 = vmatprep.subr.bf16.mxu0 0
  %1037 = vmatpush2.bf16.msra.mxu0 0
  %1038 = vmatprep.subr.bf16.mxu0 0
  %1039 = vmatpush2.bf16.msra.mxu0 0
  %1040 = vmatprep.subr.bf16.mxu0 0
  %1041 = vmatpush2.bf16.msra.mxu0 0
  %1042 = vmatprep.subr.bf16.mxu0 0
  %1043 = vmatpush2.bf16.msra.mxu0 0
  %1044 = vmatprep.subr.bf16.mxu0 0
  %1045 = vmatpush2.bf16.msra.mxu0 0
  %1046 = vmatprep.mubr.bf16.mxu0 0
  %1047 = vmatmul.mubr.bf16.gmra.mxu0 %v1013
  %v1048 = vpop.f32.mrf.mxu0
  %v1049 = vadd.f32 0.0, %v1048
  %v1050 = vpop.f32.mrf.mxu0
  %v1051 = vadd.f32 0.0, %v1050
  %v1052 = vpop.f32.mrf.mxu0
  %v1053 = vpop.f32.mrf.mxu0
  %1054 = vdwg.mxu0
  %1055 = vmatprep.subr.bf16.mxu0 %v613
  %1056 = vmatpush1.bf16.msra.mxu0 %v612
  %1057 = vmatprep.subr.bf16.mxu0 %v609
  %1058 = vmatpush1.bf16.msra.mxu0 %v608
  %1059 = vmatprep.subr.bf16.mxu0 %v605
  %1060 = vmatpush1.bf16.msra.mxu0 %v604
  %1061 = vmatprep.subr.bf16.mxu0 %v601
  %1062 = vmatpush1.bf16.msra.mxu0 %v600
  %1063 = vmatprep.subr.bf16.mxu0 %v597
  %1064 = vmatpush1.bf16.msra.mxu0 %v596
  %1065 = vmatprep.subr.bf16.mxu0 %v593
  %1066 = vmatpush1.bf16.msra.mxu0 %v592
  %1067 = vmatprep.subr.bf16.mxu0 %v589
  %1068 = vmatpush1.bf16.msra.mxu0 %v588
  %1069 = vmatprep.subr.bf16.mxu0 %v585
  %1070 = vmatpush1.bf16.msra.mxu0 %v584
  %1071 = vmatprep.subr.bf16.mxu0 0
  %1072 = vmatpush2.bf16.msra.mxu0 0
  %1073 = vmatprep.subr.bf16.mxu0 0
  %1074 = vmatpush2.bf16.msra.mxu0 0
  %1075 = vmatprep.subr.bf16.mxu0 0
  %1076 = vmatpush2.bf16.msra.mxu0 0
  %1077 = vmatprep.subr.bf16.mxu0 0
  %1078 = vmatpush2.bf16.msra.mxu0 0
  %1079 = vmatprep.subr.bf16.mxu0 0
  %1080 = vmatpush2.bf16.msra.mxu0 0
  %1081 = vmatprep.subr.bf16.mxu0 0
  %1082 = vmatpush2.bf16.msra.mxu0 0
  %1083 = vmatprep.subr.bf16.mxu0 0
  %1084 = vmatpush2.bf16.msra.mxu0 0
  %1085 = vmatprep.subr.bf16.mxu0 0
  %1086 = vmatpush2.bf16.msra.mxu0 0
  %1087 = vmatprep.mubr.bf16.mxu0 0
  %1088 = vmatmul.mubr.bf16.gmra.mxu0 %v1013
  %v1089 = vpop.f32.mrf.mxu0
  %v1090 = vadd.f32 0.0, %v1089
  %v1091 = vpop.f32.mrf.mxu0
  %v1092 = vadd.f32 0.0, %v1091
  %v1093 = vpop.f32.mrf.mxu0
  %v1094 = vpop.f32.mrf.mxu0
  %1095 = vdwg.mxu0
  %v1096 = vadd.f32 %v1008, %v1049
  %v1097 = vadd.f32 %v1009, %v1051
  %v1098 = vadd.f32 %v1010, %v1090
  %v1099 = vadd.f32 %v1011, %v1092
  %v1100 = vxor.u32 %v1096, 2147483648
  %v1101 = vmul.f32 %v1100, 1.442695
  %v1102 = vpow.pop %v1101
  %v1103 = vadd.f32 %v1102, 1.0
  %v1104 = vrcp.pop %v1103
  %v1105 = vmul.f32 1.0, %v1104
  %v1106 = vxor.u32 %v1097, 2147483648
  %v1107 = vmul.f32 %v1106, 1.442695
  %v1108 = vpow.pop %v1107
  %v1109 = vadd.f32 %v1108, 1.0
  %v1110 = vrcp.pop %v1109
  %v1111 = vmul.f32 1.0, %v1110
  %v1112 = vtanh.pop %v1098
  %v1113 = vxor.u32 %v1099, 2147483648
  %v1114 = vmul.f32 %v1113, 1.442695
  %v1115 = vpow.pop %v1114
  %v1116 = vadd.f32 %v1115, 1.0
  %v1117 = vrcp.pop %v1116
  %v1118 = vmul.f32 1.0, %v1117
  %v1119 = vld [vmem:[#allocation4] sm:$0xff]
  %v1120 = vmul.f32 %v1111, %v1119
  %v1121 = vmul.f32 %v1105, %v1112
  %v1122 = vadd.f32 %v1120, %v1121
  %v1123 = vtanh.pop %v1122
  %v1124 = vmul.f32 %v1118, %v1123
  %1125 = vst [vmem:[#allocation4] sm:$0xff] %v1122
  %1126 = vst [vmem:[#allocation3] sm:$0xff] %v1124
  %v1127 = vpack.c.bf16 %v1124, %v1124
  %s1128 = scalar_lea.vmem %s4, 12
  %1129 = vst [vmem:[%s1128] sm:$0xf] %v1127
  %s1130 = scalar_lea.vmem [#allocation2], 128
  %v1131 = vld [vmem:[%s1130] sm:$0xff]
  %v1132 = vld [vmem:[%s1130 + $0x8] sm:$0xff]
  %v1133 = vld [vmem:[%s1130 + $0x10] sm:$0xff]
  %v1134 = vld [vmem:[%s1130 + $0x18] sm:$0xff]
  %v1135 = vld [vmem:[#allocation3] sm:$0xff]
  %v1136 = vpack.c.bf16 %v1135, %v1135
  %1137 = vmatprep.subr.bf16.mxu0 %v611
  %1138 = vmatpush1.bf16.msra.mxu0 %v610
  %1139 = vmatprep.subr.bf16.mxu0 %v607
  %1140 = vmatpush1.bf16.msra.mxu0 %v606
  %1141 = vmatprep.subr.bf16.mxu0 %v603
  %1142 = vmatpush1.bf16.msra.mxu0 %v602
  %1143 = vmatprep.subr.bf16.mxu0 %v599
  %1144 = vmatpush1.bf16.msra.mxu0 %v598
  %1145 = vmatprep.subr.bf16.mxu0 %v595
  %1146 = vmatpush1.bf16.msra.mxu0 %v594
  %1147 = vmatprep.subr.bf16.mxu0 %v591
  %1148 = vmatpush1.bf16.msra.mxu0 %v590
  %1149 = vmatprep.subr.bf16.mxu0 %v587
  %1150 = vmatpush1.bf16.msra.mxu0 %v586
  %1151 = vmatprep.subr.bf16.mxu0 %v583
  %1152 = vmatpush1.bf16.msra.mxu0 %v582
  %1153 = vmatprep.subr.bf16.mxu0 0
  %1154 = vmatpush2.bf16.msra.mxu0 0
  %1155 = vmatprep.subr.bf16.mxu0 0
  %1156 = vmatpush2.bf16.msra.mxu0 0
  %1157 = vmatprep.subr.bf16.mxu0 0
  %1158 = vmatpush2.bf16.msra.mxu0 0
  %1159 = vmatprep.subr.bf16.mxu0 0
  %1160 = vmatpush2.bf16.msra.mxu0 0
  %1161 = vmatprep.subr.bf16.mxu0 0
  %1162 = vmatpush2.bf16.msra.mxu0 0
  %1163 = vmatprep.subr.bf16.mxu0 0
  %1164 = vmatpush2.bf16.msra.mxu0 0
  %1165 = vmatprep.subr.bf16.mxu0 0
  %1166 = vmatpush2.bf16.msra.mxu0 0
  %1167 = vmatprep.subr.bf16.mxu0 0
  %1168 = vmatpush2.bf16.msra.mxu0 0
  %1169 = vmatprep.mubr.bf16.mxu0 0
  %1170 = vmatmul.mubr.bf16.gmra.mxu0 %v1136
  %v1171 = vpop.f32.mrf.mxu0
  %v1172 = vadd.f32 0.0, %v1171
  %v1173 = vpop.f32.mrf.mxu0
  %v1174 = vadd.f32 0.0, %v1173
  %v1175 = vpop.f32.mrf.mxu0
  %v1176 = vpop.f32.mrf.mxu0
  %1177 = vdwg.mxu0
  %1178 = vmatprep.subr.bf16.mxu0 %v613
  %1179 = vmatpush1.bf16.msra.mxu0 %v612
  %1180 = vmatprep.subr.bf16.mxu0 %v609
  %1181 = vmatpush1.bf16.msra.mxu0 %v608
  %1182 = vmatprep.subr.bf16.mxu0 %v605
  %1183 = vmatpush1.bf16.msra.mxu0 %v604
  %1184 = vmatprep.subr.bf16.mxu0 %v601
  %1185 = vmatpush1.bf16.msra.mxu0 %v600
  %1186 = vmatprep.subr.bf16.mxu0 %v597
  %1187 = vmatpush1.bf16.msra.mxu0 %v596
  %1188 = vmatprep.subr.bf16.mxu0 %v593
  %1189 = vmatpush1.bf16.msra.mxu0 %v592
  %1190 = vmatprep.subr.bf16.mxu0 %v589
  %1191 = vmatpush1.bf16.msra.mxu0 %v588
  %1192 = vmatprep.subr.bf16.mxu0 %v585
  %1193 = vmatpush1.bf16.msra.mxu0 %v584
  %1194 = vmatprep.subr.bf16.mxu0 0
  %1195 = vmatpush2.bf16.msra.mxu0 0
  %1196 = vmatprep.subr.bf16.mxu0 0
  %1197 = vmatpush2.bf16.msra.mxu0 0
  %1198 = vmatprep.subr.bf16.mxu0 0
  %1199 = vmatpush2.bf16.msra.mxu0 0
  %1200 = vmatprep.subr.bf16.mxu0 0
  %1201 = vmatpush2.bf16.msra.mxu0 0
  %1202 = vmatprep.subr.bf16.mxu0 0
  %1203 = vmatpush2.bf16.msra.mxu0 0
  %1204 = vmatprep.subr.bf16.mxu0 0
  %1205 = vmatpush2.bf16.msra.mxu0 0
  %1206 = vmatprep.subr.bf16.mxu0 0
  %1207 = vmatpush2.bf16.msra.mxu0 0
  %1208 = vmatprep.subr.bf16.mxu0 0
  %1209 = vmatpush2.bf16.msra.mxu0 0
  %1210 = vmatprep.mubr.bf16.mxu0 0
  %1211 = vmatmul.mubr.bf16.gmra.mxu0 %v1136
  %v1212 = vpop.f32.mrf.mxu0
  %v1213 = vadd.f32 0.0, %v1212
  %v1214 = vpop.f32.mrf.mxu0
  %v1215 = vadd.f32 0.0, %v1214
  %v1216 = vpop.f32.mrf.mxu0
  %v1217 = vpop.f32.mrf.mxu0
  %1218 = vdwg.mxu0
  %v1219 = vadd.f32 %v1131, %v1172
  %v1220 = vadd.f32 %v1132, %v1174
  %v1221 = vadd.f32 %v1133, %v1213
  %v1222 = vadd.f32 %v1134, %v1215
  %v1223 = vxor.u32 %v1219, 2147483648
  %v1224 = vmul.f32 %v1223, 1.442695
  %v1225 = vpow.pop %v1224
  %v1226 = vadd.f32 %v1225, 1.0
  %v1227 = vrcp.pop %v1226
  %v1228 = vmul.f32 1.0, %v1227
  %v1229 = vxor.u32 %v1220, 2147483648
  %v1230 = vmul.f32 %v1229, 1.442695
  %v1231 = vpow.pop %v1230
  %v1232 = vadd.f32 %v1231, 1.0
  %v1233 = vrcp.pop %v1232
  %v1234 = vmul.f32 1.0, %v1233
  %v1235 = vtanh.pop %v1221
  %v1236 = vxor.u32 %v1222, 2147483648
  %v1237 = vmul.f32 %v1236, 1.442695
  %v1238 = vpow.pop %v1237
  %v1239 = vadd.f32 %v1238, 1.0
  %v1240 = vrcp.pop %v1239
  %v1241 = vmul.f32 1.0, %v1240
  %v1242 = vld [vmem:[#allocation4] sm:$0xff]
  %v1243 = vmul.f32 %v1234, %v1242
  %v1244 = vmul.f32 %v1228, %v1235
  %v1245 = vadd.f32 %v1243, %v1244
  %v1246 = vtanh.pop %v1245
  %v1247 = vmul.f32 %v1241, %v1246
  %1248 = vst [vmem:[#allocation4] sm:$0xff] %v1245
  %1249 = vst [vmem:[#allocation3] sm:$0xff] %v1247
  %v1250 = vpack.c.bf16 %v1247, %v1247
  %s1251 = scalar_lea.vmem %s4, 16
  %1252 = vst [vmem:[%s1251] sm:$0xf] %v1250
  %s1253 = scalar_lea.vmem [#allocation2], 160
  %v1254 = vld [vmem:[%s1253] sm:$0xff]
  %v1255 = vld [vmem:[%s1253 + $0x8] sm:$0xff]
  %v1256 = vld [vmem:[%s1253 + $0x10] sm:$0xff]
  %v1257 = vld [vmem:[%s1253 + $0x18] sm:$0xff]
  %v1258 = vld [vmem:[#allocation3] sm:$0xff]
  %v1259 = vpack.c.bf16 %v1258, %v1258
  %1260 = vmatprep.subr.bf16.mxu0 %v611
  %1261 = vmatpush1.bf16.msra.mxu0 %v610
  %1262 = vmatprep.subr.bf16.mxu0 %v607
  %1263 = vmatpush1.bf16.msra.mxu0 %v606
  %1264 = vmatprep.subr.bf16.mxu0 %v603
  %1265 = vmatpush1.bf16.msra.mxu0 %v602
  %1266 = vmatprep.subr.bf16.mxu0 %v599
  %1267 = vmatpush1.bf16.msra.mxu0 %v598
  %1268 = vmatprep.subr.bf16.mxu0 %v595
  %1269 = vmatpush1.bf16.msra.mxu0 %v594
  %1270 = vmatprep.subr.bf16.mxu0 %v591
  %1271 = vmatpush1.bf16.msra.mxu0 %v590
  %1272 = vmatprep.subr.bf16.mxu0 %v587
  %1273 = vmatpush1.bf16.msra.mxu0 %v586
  %1274 = vmatprep.subr.bf16.mxu0 %v583
  %1275 = vmatpush1.bf16.msra.mxu0 %v582
  %1276 = vmatprep.subr.bf16.mxu0 0
  %1277 = vmatpush2.bf16.msra.mxu0 0
  %1278 = vmatprep.subr.bf16.mxu0 0
  %1279 = vmatpush2.bf16.msra.mxu0 0
  %1280 = vmatprep.subr.bf16.mxu0 0
  %1281 = vmatpush2.bf16.msra.mxu0 0
  %1282 = vmatprep.subr.bf16.mxu0 0
  %1283 = vmatpush2.bf16.msra.mxu0 0
  %1284 = vmatprep.subr.bf16.mxu0 0
  %1285 = vmatpush2.bf16.msra.mxu0 0
  %1286 = vmatprep.subr.bf16.mxu0 0
  %1287 = vmatpush2.bf16.msra.mxu0 0
  %1288 = vmatprep.subr.bf16.mxu0 0
  %1289 = vmatpush2.bf16.msra.mxu0 0
  %1290 = vmatprep.subr.bf16.mxu0 0
  %1291 = vmatpush2.bf16.msra.mxu0 0
  %1292 = vmatprep.mubr.bf16.mxu0 0
  %1293 = vmatmul.mubr.bf16.gmra.mxu0 %v1259
  %v1294 = vpop.f32.mrf.mxu0
  %v1295 = vadd.f32 0.0, %v1294
  %v1296 = vpop.f32.mrf.mxu0
  %v1297 = vadd.f32 0.0, %v1296
  %v1298 = vpop.f32.mrf.mxu0
  %v1299 = vpop.f32.mrf.mxu0
  %1300 = vdwg.mxu0
  %1301 = vmatprep.subr.bf16.mxu0 %v613
  %1302 = vmatpush1.bf16.msra.mxu0 %v612
  %1303 = vmatprep.subr.bf16.mxu0 %v609
  %1304 = vmatpush1.bf16.msra.mxu0 %v608
  %1305 = vmatprep.subr.bf16.mxu0 %v605
  %1306 = vmatpush1.bf16.msra.mxu0 %v604
  %1307 = vmatprep.subr.bf16.mxu0 %v601
  %1308 = vmatpush1.bf16.msra.mxu0 %v600
  %1309 = vmatprep.subr.bf16.mxu0 %v597
  %1310 = vmatpush1.bf16.msra.mxu0 %v596
  %1311 = vmatprep.subr.bf16.mxu0 %v593
  %1312 = vmatpush1.bf16.msra.mxu0 %v592
  %1313 = vmatprep.subr.bf16.mxu0 %v589
  %1314 = vmatpush1.bf16.msra.mxu0 %v588
  %1315 = vmatprep.subr.bf16.mxu0 %v585
  %1316 = vmatpush1.bf16.msra.mxu0 %v584
  %1317 = vmatprep.subr.bf16.mxu0 0
  %1318 = vmatpush2.bf16.msra.mxu0 0
  %1319 = vmatprep.subr.bf16.mxu0 0
  %1320 = vmatpush2.bf16.msra.mxu0 0
  %1321 = vmatprep.subr.bf16.mxu0 0
  %1322 = vmatpush2.bf16.msra.mxu0 0
  %1323 = vmatprep.subr.bf16.mxu0 0
  %1324 = vmatpush2.bf16.msra.mxu0 0
  %1325 = vmatprep.subr.bf16.mxu0 0
  %1326 = vmatpush2.bf16.msra.mxu0 0
  %1327 = vmatprep.subr.bf16.mxu0 0
  %1328 = vmatpush2.bf16.msra.mxu0 0
  %1329 = vmatprep.subr.bf16.mxu0 0
  %1330 = vmatpush2.bf16.msra.mxu0 0
  %1331 = vmatprep.subr.bf16.mxu0 0
  %1332 = vmatpush2.bf16.msra.mxu0 0
  %1333 = vmatprep.mubr.bf16.mxu0 0
  %1334 = vmatmul.mubr.bf16.gmra.mxu0 %v1259
  %v1335 = vpop.f32.mrf.mxu0
  %v1336 = vadd.f32 0.0, %v1335
  %v1337 = vpop.f32.mrf.mxu0
  %v1338 = vadd.f32 0.0, %v1337
  %v1339 = vpop.f32.mrf.mxu0
  %v1340 = vpop.f32.mrf.mxu0
  %1341 = vdwg.mxu0
  %v1342 = vadd.f32 %v1254, %v1295
  %v1343 = vadd.f32 %v1255, %v1297
  %v1344 = vadd.f32 %v1256, %v1336
  %v1345 = vadd.f32 %v1257, %v1338
  %v1346 = vxor.u32 %v1342, 2147483648
  %v1347 = vmul.f32 %v1346, 1.442695
  %v1348 = vpow.pop %v1347
  %v1349 = vadd.f32 %v1348, 1.0
  %v1350 = vrcp.pop %v1349
  %v1351 = vmul.f32 1.0, %v1350
  %v1352 = vxor.u32 %v1343, 2147483648
  %v1353 = vmul.f32 %v1352, 1.442695
  %v1354 = vpow.pop %v1353
  %v1355 = vadd.f32 %v1354, 1.0
  %v1356 = vrcp.pop %v1355
  %v1357 = vmul.f32 1.0, %v1356
  %v1358 = vtanh.pop %v1344
  %v1359 = vxor.u32 %v1345, 2147483648
  %v1360 = vmul.f32 %v1359, 1.442695
  %v1361 = vpow.pop %v1360
  %v1362 = vadd.f32 %v1361, 1.0
  %v1363 = vrcp.pop %v1362
  %v1364 = vmul.f32 1.0, %v1363
  %v1365 = vld [vmem:[#allocation4] sm:$0xff]
  %v1366 = vmul.f32 %v1357, %v1365
  %v1367 = vmul.f32 %v1351, %v1358
  %v1368 = vadd.f32 %v1366, %v1367
  %v1369 = vtanh.pop %v1368
  %v1370 = vmul.f32 %v1364, %v1369
  %1371 = vst [vmem:[#allocation4] sm:$0xff] %v1368
  %1372 = vst [vmem:[#allocation3] sm:$0xff] %v1370
  %v1373 = vpack.c.bf16 %v1370, %v1370
  %s1374 = scalar_lea.vmem %s4, 20
  %1375 = vst [vmem:[%s1374] sm:$0xf] %v1373
  %s1376 = scalar_lea.vmem [#allocation2], 192
  %v1377 = vld [vmem:[%s1376] sm:$0xff]
  %v1378 = vld [vmem:[%s1376 + $0x8] sm:$0xff]
  %v1379 = vld [vmem:[%s1376 + $0x10] sm:$0xff]
  %v1380 = vld [vmem:[%s1376 + $0x18] sm:$0xff]
  %v1381 = vld [vmem:[#allocation3] sm:$0xff]
  %v1382 = vpack.c.bf16 %v1381, %v1381
  %1383 = vmatprep.subr.bf16.mxu0 %v611
  %1384 = vmatpush1.bf16.msra.mxu0 %v610
  %1385 = vmatprep.subr.bf16.mxu0 %v607
  %1386 = vmatpush1.bf16.msra.mxu0 %v606
  %1387 = vmatprep.subr.bf16.mxu0 %v603
  %1388 = vmatpush1.bf16.msra.mxu0 %v602
  %1389 = vmatprep.subr.bf16.mxu0 %v599
  %1390 = vmatpush1.bf16.msra.mxu0 %v598
  %1391 = vmatprep.subr.bf16.mxu0 %v595
  %1392 = vmatpush1.bf16.msra.mxu0 %v594
  %1393 = vmatprep.subr.bf16.mxu0 %v591
  %1394 = vmatpush1.bf16.msra.mxu0 %v590
  %1395 = vmatprep.subr.bf16.mxu0 %v587
  %1396 = vmatpush1.bf16.msra.mxu0 %v586
  %1397 = vmatprep.subr.bf16.mxu0 %v583
  %1398 = vmatpush1.bf16.msra.mxu0 %v582
  %1399 = vmatprep.subr.bf16.mxu0 0
  %1400 = vmatpush2.bf16.msra.mxu0 0
  %1401 = vmatprep.subr.bf16.mxu0 0
  %1402 = vmatpush2.bf16.msra.mxu0 0
  %1403 = vmatprep.subr.bf16.mxu0 0
  %1404 = vmatpush2.bf16.msra.mxu0 0
  %1405 = vmatprep.subr.bf16.mxu0 0
  %1406 = vmatpush2.bf16.msra.mxu0 0
  %1407 = vmatprep.subr.bf16.mxu0 0
  %1408 = vmatpush2.bf16.msra.mxu0 0
  %1409 = vmatprep.subr.bf16.mxu0 0
  %1410 = vmatpush2.bf16.msra.mxu0 0
  %1411 = vmatprep.subr.bf16.mxu0 0
  %1412 = vmatpush2.bf16.msra.mxu0 0
  %1413 = vmatprep.subr.bf16.mxu0 0
  %1414 = vmatpush2.bf16.msra.mxu0 0
  %1415 = vmatprep.mubr.bf16.mxu0 0
  %1416 = vmatmul.mubr.bf16.gmra.mxu0 %v1382
  %v1417 = vpop.f32.mrf.mxu0
  %v1418 = vadd.f32 0.0, %v1417
  %v1419 = vpop.f32.mrf.mxu0
  %v1420 = vadd.f32 0.0, %v1419
  %v1421 = vpop.f32.mrf.mxu0
  %v1422 = vpop.f32.mrf.mxu0
  %1423 = vdwg.mxu0
  %1424 = vmatprep.subr.bf16.mxu0 %v613
  %1425 = vmatpush1.bf16.msra.mxu0 %v612
  %1426 = vmatprep.subr.bf16.mxu0 %v609
  %1427 = vmatpush1.bf16.msra.mxu0 %v608
  %1428 = vmatprep.subr.bf16.mxu0 %v605
  %1429 = vmatpush1.bf16.msra.mxu0 %v604
  %1430 = vmatprep.subr.bf16.mxu0 %v601
  %1431 = vmatpush1.bf16.msra.mxu0 %v600
  %1432 = vmatprep.subr.bf16.mxu0 %v597
  %1433 = vmatpush1.bf16.msra.mxu0 %v596
  %1434 = vmatprep.subr.bf16.mxu0 %v593
  %1435 = vmatpush1.bf16.msra.mxu0 %v592
  %1436 = vmatprep.subr.bf16.mxu0 %v589
  %1437 = vmatpush1.bf16.msra.mxu0 %v588
  %1438 = vmatprep.subr.bf16.mxu0 %v585
  %1439 = vmatpush1.bf16.msra.mxu0 %v584
  %1440 = vmatprep.subr.bf16.mxu0 0
  %1441 = vmatpush2.bf16.msra.mxu0 0
  %1442 = vmatprep.subr.bf16.mxu0 0
  %1443 = vmatpush2.bf16.msra.mxu0 0
  %1444 = vmatprep.subr.bf16.mxu0 0
  %1445 = vmatpush2.bf16.msra.mxu0 0
  %1446 = vmatprep.subr.bf16.mxu0 0
  %1447 = vmatpush2.bf16.msra.mxu0 0
  %1448 = vmatprep.subr.bf16.mxu0 0
  %1449 = vmatpush2.bf16.msra.mxu0 0
  %1450 = vmatprep.subr.bf16.mxu0 0
  %1451 = vmatpush2.bf16.msra.mxu0 0
  %1452 = vmatprep.subr.bf16.mxu0 0
  %1453 = vmatpush2.bf16.msra.mxu0 0
  %1454 = vmatprep.subr.bf16.mxu0 0
  %1455 = vmatpush2.bf16.msra.mxu0 0
  %1456 = vmatprep.mubr.bf16.mxu0 0
  %1457 = vmatmul.mubr.bf16.gmra.mxu0 %v1382
  %v1458 = vpop.f32.mrf.mxu0
  %v1459 = vadd.f32 0.0, %v1458
  %v1460 = vpop.f32.mrf.mxu0
  %v1461 = vadd.f32 0.0, %v1460
  %v1462 = vpop.f32.mrf.mxu0
  %v1463 = vpop.f32.mrf.mxu0
  %1464 = vdwg.mxu0
  %v1465 = vadd.f32 %v1377, %v1418
  %v1466 = vadd.f32 %v1378, %v1420
  %v1467 = vadd.f32 %v1379, %v1459
  %v1468 = vadd.f32 %v1380, %v1461
  %v1469 = vxor.u32 %v1465, 2147483648
  %v1470 = vmul.f32 %v1469, 1.442695
  %v1471 = vpow.pop %v1470
  %v1472 = vadd.f32 %v1471, 1.0
  %v1473 = vrcp.pop %v1472
  %v1474 = vmul.f32 1.0, %v1473
  %v1475 = vxor.u32 %v1466, 2147483648
  %v1476 = vmul.f32 %v1475, 1.442695
  %v1477 = vpow.pop %v1476
  %v1478 = vadd.f32 %v1477, 1.0
  %v1479 = vrcp.pop %v1478
  %v1480 = vmul.f32 1.0, %v1479
  %v1481 = vtanh.pop %v1467
  %v1482 = vxor.u32 %v1468, 2147483648
  %v1483 = vmul.f32 %v1482, 1.442695
  %v1484 = vpow.pop %v1483
  %v1485 = vadd.f32 %v1484, 1.0
  %v1486 = vrcp.pop %v1485
  %v1487 = vmul.f32 1.0, %v1486
  %v1488 = vld [vmem:[#allocation4] sm:$0xff]
  %v1489 = vmul.f32 %v1480, %v1488
  %v1490 = vmul.f32 %v1474, %v1481
  %v1491 = vadd.f32 %v1489, %v1490
  %v1492 = vtanh.pop %v1491
  %v1493 = vmul.f32 %v1487, %v1492
  %1494 = vst [vmem:[#allocation4] sm:$0xff] %v1491
  %1495 = vst [vmem:[#allocation3] sm:$0xff] %v1493
  %v1496 = vpack.c.bf16 %v1493, %v1493
  %s1497 = scalar_lea.vmem %s4, 24
  %1498 = vst [vmem:[%s1497] sm:$0xf] %v1496
  %s1499 = scalar_lea.vmem [#allocation2], 224
  %v1500 = vld [vmem:[%s1499] sm:$0xff]
  %v1501 = vld [vmem:[%s1499 + $0x8] sm:$0xff]
  %v1502 = vld [vmem:[%s1499 + $0x10] sm:$0xff]
  %v1503 = vld [vmem:[%s1499 + $0x18] sm:$0xff]
  %v1504 = vld [vmem:[#allocation3] sm:$0xff]
  %v1505 = vpack.c.bf16 %v1504, %v1504
  %1506 = vmatprep.subr.bf16.mxu0 %v611
  %1507 = vmatpush1.bf16.msra.mxu0 %v610
  %1508 = vmatprep.subr.bf16.mxu0 %v607
  %1509 = vmatpush1.bf16.msra.mxu0 %v606
  %1510 = vmatprep.subr.bf16.mxu0 %v603
  %1511 = vmatpush1.bf16.msra.mxu0 %v602
  %1512 = vmatprep.subr.bf16.mxu0 %v599
  %1513 = vmatpush1.bf16.msra.mxu0 %v598
  %1514 = vmatprep.subr.bf16.mxu0 %v595
  %1515 = vmatpush1.bf16.msra.mxu0 %v594
  %1516 = vmatprep.subr.bf16.mxu0 %v591
  %1517 = vmatpush1.bf16.msra.mxu0 %v590
  %1518 = vmatprep.subr.bf16.mxu0 %v587
  %1519 = vmatpush1.bf16.msra.mxu0 %v586
  %1520 = vmatprep.subr.bf16.mxu0 %v583
  %1521 = vmatpush1.bf16.msra.mxu0 %v582
  %1522 = vmatprep.subr.bf16.mxu0 0
  %1523 = vmatpush2.bf16.msra.mxu0 0
  %1524 = vmatprep.subr.bf16.mxu0 0
  %1525 = vmatpush2.bf16.msra.mxu0 0
  %1526 = vmatprep.subr.bf16.mxu0 0
  %1527 = vmatpush2.bf16.msra.mxu0 0
  %1528 = vmatprep.subr.bf16.mxu0 0
  %1529 = vmatpush2.bf16.msra.mxu0 0
  %1530 = vmatprep.subr.bf16.mxu0 0
  %1531 = vmatpush2.bf16.msra.mxu0 0
  %1532 = vmatprep.subr.bf16.mxu0 0
  %1533 = vmatpush2.bf16.msra.mxu0 0
  %1534 = vmatprep.subr.bf16.mxu0 0
  %1535 = vmatpush2.bf16.msra.mxu0 0
  %1536 = vmatprep.subr.bf16.mxu0 0
  %1537 = vmatpush2.bf16.msra.mxu0 0
  %1538 = vmatprep.mubr.bf16.mxu0 0
  %1539 = vmatmul.mubr.bf16.gmra.mxu0 %v1505
  %v1540 = vpop.f32.mrf.mxu0
  %v1541 = vadd.f32 0.0, %v1540
  %v1542 = vpop.f32.mrf.mxu0
  %v1543 = vadd.f32 0.0, %v1542
  %v1544 = vpop.f32.mrf.mxu0
  %v1545 = vpop.f32.mrf.mxu0
  %1546 = vdwg.mxu0
  %1547 = vmatprep.subr.bf16.mxu0 %v613
  %1548 = vmatpush1.bf16.msra.mxu0 %v612
  %1549 = vmatprep.subr.bf16.mxu0 %v609
  %1550 = vmatpush1.bf16.msra.mxu0 %v608
  %1551 = vmatprep.subr.bf16.mxu0 %v605
  %1552 = vmatpush1.bf16.msra.mxu0 %v604
  %1553 = vmatprep.subr.bf16.mxu0 %v601
  %1554 = vmatpush1.bf16.msra.mxu0 %v600
  %1555 = vmatprep.subr.bf16.mxu0 %v597
  %1556 = vmatpush1.bf16.msra.mxu0 %v596
  %1557 = vmatprep.subr.bf16.mxu0 %v593
  %1558 = vmatpush1.bf16.msra.mxu0 %v592
  %1559 = vmatprep.subr.bf16.mxu0 %v589
  %1560 = vmatpush1.bf16.msra.mxu0 %v588
  %1561 = vmatprep.subr.bf16.mxu0 %v585
  %1562 = vmatpush1.bf16.msra.mxu0 %v584
  %1563 = vmatprep.subr.bf16.mxu0 0
  %1564 = vmatpush2.bf16.msra.mxu0 0
  %1565 = vmatprep.subr.bf16.mxu0 0
  %1566 = vmatpush2.bf16.msra.mxu0 0
  %1567 = vmatprep.subr.bf16.mxu0 0
  %1568 = vmatpush2.bf16.msra.mxu0 0
  %1569 = vmatprep.subr.bf16.mxu0 0
  %1570 = vmatpush2.bf16.msra.mxu0 0
  %1571 = vmatprep.subr.bf16.mxu0 0
  %1572 = vmatpush2.bf16.msra.mxu0 0
  %1573 = vmatprep.subr.bf16.mxu0 0
  %1574 = vmatpush2.bf16.msra.mxu0 0
  %1575 = vmatprep.subr.bf16.mxu0 0
  %1576 = vmatpush2.bf16.msra.mxu0 0
  %1577 = vmatprep.subr.bf16.mxu0 0
  %1578 = vmatpush2.bf16.msra.mxu0 0
  %1579 = vmatprep.mubr.bf16.mxu0 0
  %1580 = vmatmul.mubr.bf16.gmra.mxu0 %v1505
  %v1581 = vpop.f32.mrf.mxu0
  %v1582 = vadd.f32 0.0, %v1581
  %v1583 = vpop.f32.mrf.mxu0
  %v1584 = vadd.f32 0.0, %v1583
  %v1585 = vpop.f32.mrf.mxu0
  %v1586 = vpop.f32.mrf.mxu0
  %1587 = vdwg.mxu0
  %v1588 = vadd.f32 %v1500, %v1541
  %v1589 = vadd.f32 %v1501, %v1543
  %v1590 = vadd.f32 %v1502, %v1582
  %v1591 = vadd.f32 %v1503, %v1584
  %v1592 = vxor.u32 %v1588, 2147483648
  %v1593 = vmul.f32 %v1592, 1.442695
  %v1594 = vpow.pop %v1593
  %v1595 = vadd.f32 %v1594, 1.0
  %v1596 = vrcp.pop %v1595
  %v1597 = vmul.f32 1.0, %v1596
  %v1598 = vxor.u32 %v1589, 2147483648
  %v1599 = vmul.f32 %v1598, 1.442695
  %v1600 = vpow.pop %v1599
  %v1601 = vadd.f32 %v1600, 1.0
  %v1602 = vrcp.pop %v1601
  %v1603 = vmul.f32 1.0, %v1602
  %v1604 = vtanh.pop %v1590
  %v1605 = vxor.u32 %v1591, 2147483648
  %v1606 = vmul.f32 %v1605, 1.442695
  %v1607 = vpow.pop %v1606
  %v1608 = vadd.f32 %v1607, 1.0
  %v1609 = vrcp.pop %v1608
  %v1610 = vmul.f32 1.0, %v1609
  %v1611 = vld [vmem:[#allocation4] sm:$0xff]
  %v1612 = vmul.f32 %v1603, %v1611
  %v1613 = vmul.f32 %v1597, %v1604
  %v1614 = vadd.f32 %v1612, %v1613
  %v1615 = vtanh.pop %v1614
  %v1616 = vmul.f32 %v1610, %v1615
  %1617 = vst [vmem:[#allocation4] sm:$0xff] %v1614
  %1618 = vst [vmem:[#allocation3] sm:$0xff] %v1616
  %v1619 = vpack.c.bf16 %v1616, %v1616
  %s1620 = scalar_lea.vmem %s4, 28
  %1621 = vst [vmem:[%s1620] sm:$0xf] %v1619
  // Predicated region
  $region22: #{decoder_rnn_forward.2} parent=0 // pred_check
    _
  $region23: #{decoder_rnn_forward.2} parent=0 // pred_check_branch
    %1623 = sbr.rel (0) target = $region25
  $region24: #{decoder_rnn_forward.2} parent=0 // pred_region
    _
  $region25: #{decoder_rnn_forward.2} parent=0 // pred_fallthru
    _
  // Predicated region
  $region26: #{decoder_rnn_forward.2} parent=0 // pred_check
    _
  $region27: #{decoder_rnn_forward.2} parent=0 // pred_check_branch
    %1625 = sbr.rel (0) target = $region29
  $region28: #{decoder_rnn_forward.2} parent=0 // pred_region
    _
  $region29: #{decoder_rnn_forward.2} parent=0 // pred_fallthru
    _

</llo_original>
